<compile_context>
chip_gen: v5e
topology: v5e:2x2
jax: 0.10.0
libtpu: 0.0.40
codegen_flags: <defaults>
</compile_context>

<pallas_src>
import math

import jax
import jax.numpy as jnp
import numpy as np
from jax.experimental import pallas as pl
from jax.experimental.pallas import tpu as pltpu

BN_EPS = 1e-5


# ----------------------------------------------------------------------------
# Fused Pallas kernel: 3x [DSConv (banded MXU matmuls) -> BN (batch stats) -> ReLU]
# ----------------------------------------------------------------------------
def fused_updsconv3_kernel(y_ref,
                           m1_ref, p1_ref, g1_ref, b1_ref,
                           m2_ref, p2_ref, g2_ref, b2_ref,
                           m3_ref, p3_ref, g3_ref, b3_ref,
                           o_ref, pad_ref):
    """Three fused [DSConv -> BatchNorm -> ReLU] blocks, all VMEM-resident.

    y_ref   : (N, H, W*Cin)          lane-dense folded NHWC input
    m*_ref  : (k, W*Ci, W*Co)        banded depthwise*pointwise weights per dy
    p*_ref  : (W*Co, W*Co)           channel-averaging matrix (c==c')/count
    g*/b*   : (1, W*Co)              BN gamma/beta tiled across W (folded lanes)
    o_ref   : (N, H, W*Cout)
    pad_ref : (N, H + 2*pad, W*Cin)  scratch for in-kernel H halo padding
    """
    N, H, _ = o_ref.shape
    k = m1_ref.shape[0]
    pad = k // 2

    # Zero the halo rows once; the interior is fully overwritten by each block.
    pad_ref[...] = jnp.zeros_like(pad_ref)

    def block(y3d, m_ref, p_ref, g_ref, b_ref):
        wcin, wcout = m_ref.shape[1], m_ref.shape[2]
        pad_ref[:, pad:pad + H, :] = y3d

        # Depthwise + pointwise conv == k banded matmuls on the MXU.
        acc = jnp.zeros((N * H, wcout), jnp.float32)
        for dy in range(k):
            lhs = pad_ref[:, dy:dy + H, :].reshape(N * H, wcin)
            acc = acc + jnp.dot(lhs, m_ref[dy],
                                preferred_element_type=jnp.float32)

        # BatchNorm2d with training-mode batch statistics, single reduction
        # pass (sum + sum-of-squares), then folded scale/shift FMA + ReLU.
        colsum = jnp.sum(acc, axis=0, keepdims=True)        # (1, W*Co)
        colsq = jnp.sum(acc * acc, axis=0, keepdims=True)   # (1, W*Co)
        mean = jnp.dot(colsum, p_ref[...], preferred_element_type=jnp.float32)
        meansq = jnp.dot(colsq, p_ref[...], preferred_element_type=jnp.float32)
        var = jnp.maximum(meansq - mean * mean, 0.0)
        scale = g_ref[...] * jax.lax.rsqrt(var + BN_EPS)
        shift = b_ref[...] - mean * scale
        z = jnp.maximum(acc * scale + shift, 0.0)
        return z.reshape(N, H, wcout)

    y = block(y_ref[...], m1_ref, p1_ref, g1_ref, b1_ref)
    y = block(y, m2_ref, p2_ref, g2_ref, b2_ref)
    o_ref[...] = block(y, m3_ref, p3_ref, g3_ref, b3_ref)


# ----------------------------------------------------------------------------
# Wrapper-side weight preparation (plain JAX, tiny, done once)
# ----------------------------------------------------------------------------
def prep_block_params(dw, pw, gamma, beta, k, W, count):
    """Fold one block's weights into MXU-friendly operands.

    dw (k*k, Cin), pw (Cin, Cout), gamma/beta (1, Cout)  ->
      mats (k, W*Cin, W*Cout) : mats[dy][w_in*Cin+c, w_out*Cout+o]
                                = dw[dy*k+dx, c] * pw[c, o], dx = w_in-w_out+pad
                                (the band also realizes the zero-padding in W)
      P    (W*Cout, W*Cout)   : per-channel averaging matrix (c==c')/count
      g/b  (1, W*Cout)        : gamma/beta tiled across W (folded-lane layout)
    """
    Cin, Cout = pw.shape
    pad = k // 2
    w_eff = dw.reshape(k, k, Cin)[:, :, :, None] * pw[None, None, :, :]  # (k,k,Cin,Cout)
    r = jnp.arange(W)
    offs = r[:, None] - r[None, :]                                       # w_in - w_out
    mats = []
    for dy in range(k):
        m = jnp.zeros((W, Cin, W, Cout), jnp.float32)
        for dx in range(k):
            band = (offs == (dx - pad)).astype(jnp.float32)              # (W, W)
            m = m + band[:, None, :, None] * w_eff[dy, dx][None, :, None, :]
        mats.append(m.reshape(W * Cin, W * Cout))
    mats = jnp.stack(mats, axis=0)                                       # (k, WCi, WCo)
    P = jnp.tile(jnp.eye(Cout, dtype=jnp.float32), (W, W)) / float(count)
    g_f = jnp.tile(gamma.reshape(1, Cout), (1, W))
    b_f = jnp.tile(beta.reshape(1, Cout), (1, W))
    return mats, P, g_f, b_f


def fused_blocks(y_folded, prepped):
    """Run the three fused DSConv+BN+ReLU blocks in one pallas_call."""
    N, H, WCin = y_folded.shape
    (m1, p1, g1, b1), (m2, p2, g2, b2), (m3, p3, g3, b3) = prepped
    k = m1.shape[0]
    pad = k // 2
    WCout = m3.shape[2]
    # Total VMEM footprint is ~1.3 MiB at the test shapes — far under the
    # default scoped VMEM limit, so no vmem_limit_bytes override is needed.
    # TODO(synk): for production SegNet sizes (C>=64, H=W>=128, N>=4), tile
    # over rows with a halo index_map + a two-pass BN (stats then normalize)
    # and mark the row axis "parallel" so v7x's 2 TensorCores are used and the
    # working set fits v7x's 64 MiB VMEM; at these tiny shapes a gridless
    # single program minimizes launch/DMA overhead.
    return pl.pallas_call(
        fused_updsconv3_kernel,
        out_shape=jax.ShapeDtypeStruct((N, H, WCout), jnp.float32),
        in_specs=[pl.BlockSpec(memory_space=pltpu.MemorySpace.VMEM)] * 13,
        out_specs=pl.BlockSpec(memory_space=pltpu.MemorySpace.VMEM),
        scratch_shapes=[pltpu.VMEM((N, H + 2 * pad, WCin), jnp.float32)],
    )(y_folded, m1, p1, g1, b1, m2, p2, g2, b2, m3, p3, g3, b3)


# ----------------------------------------------------------------------------
# MaxUnpool2d(kernel_size=2) — scatter-free broadcast-compare-select glue.
# ----------------------------------------------------------------------------
def max_unpool2d_nchw(x, indices, output_size):
    """Scatter-free MaxUnpool2d(2). Assumes each flat index lies inside its own
    2x2 cell — guaranteed for indices produced by MaxPool2d(2, return_indices=True).
    """
    # TODO(synk): data-dependent scatter; kept as plain-JAX select glue (pure
    # data movement, not the hot path), not a Pallas kernel.
    N, C, Hp, Wp = x.shape
    Ho, Wo = output_size
    rh, rw = Ho // Hp, Wo // Wp
    x_up = jnp.repeat(jnp.repeat(x, rh, axis=2), rw, axis=3)
    idx_up = jnp.repeat(jnp.repeat(indices, rh, axis=2), rw, axis=3)
    pos = (jnp.arange(Ho, dtype=indices.dtype)[:, None] * Wo
           + jnp.arange(Wo, dtype=indices.dtype)[None, :])
    return jnp.where(idx_up == pos[None, None], x_up, jnp.zeros_like(x_up))


# ----------------------------------------------------------------------------
# UpDSConv3.forward
# ----------------------------------------------------------------------------
def up_ds_conv3_forward(x_nchw, indices, output_size, params):
    """x_nchw: (N, chin, Hp, Wp); indices: same shape (flat H*W output indices)."""
    N, chin = x_nchw.shape[0], x_nchw.shape[1]
    Ho, Wo = output_size
    chout = params[-1][1].shape[1]
    k = int(round(math.sqrt(params[0][0].shape[0])))

    y = max_unpool2d_nchw(x_nchw, indices, output_size)              # (N, chin, Ho, Wo)
    y_f = jnp.transpose(y, (0, 2, 3, 1)).reshape(N, Ho, Wo * chin)   # lane-dense fold

    count = N * Ho * Wo
    prepped = [prep_block_params(dw, pw, g, b, k, Wo, count)
               for (dw, pw, g, b) in params]
    out_f = fused_blocks(y_f, prepped)                               # (N, Ho, Wo*chout)
    return jnp.transpose(out_f.reshape(N, Ho, Wo, chout), (0, 3, 1, 2))


def init_params(key, chin, chout, k):
    """Deterministic synthetic weights.

    Per block: dw (k*k, Cin)  == PyTorch depthwise weight (Cin,1,k,k) with
                                 dw[dy*k+dx, c] = W[c, 0, dy, dx]
               pw (Cin, Cout) == PyTorch pointwise weight (Cout,Cin,1,1).T
               gamma/beta (1, Cout)  BN affine parameters.
    """
    chans = [(chin, chin), (chin, chin), (chin, chout)]
    params = []
    for ci, co in chans:
        key, k1, k2, k3, k4 = jax.random.split(key, 5)
        dw = 0.3 * jax.random.normal(k1, (k * k, ci), jnp.float32)
        pw = 0.3 * jax.random.normal(k2, (ci, co), jnp.float32)
        gamma = 1.0 + 0.1 * jax.random.normal(k3, (1, co), jnp.float32)
        beta = 0.1 * jax.random.normal(k4, (1, co), jnp.float32)
        params.append((dw, pw, gamma, beta))
    return params


# ----------------------------------------------------------------------------
# Pure-JAX reference (for correctness check only)
# ----------------------------------------------------------------------------
def _ref_unpool(x, indices, output_size):
    N, C, Hp, Wp = x.shape
    Ho, Wo = output_size
    flat_idx = indices.reshape(N, C, Hp * Wp)
    flat_val = x.reshape(N, C, Hp * Wp)
    scat = lambda i, v: jnp.zeros((Ho * Wo,), x.dtype).at[i].set(v)
    out = jax.vmap(jax.vmap(scat))(flat_idx, flat_val)
    return out.reshape(N, C, Ho, Wo)


def _ref_block(y_nchw, dw, pw, gamma, beta, k):
    Cin = y_nchw.shape[1]
    dw_oihw = jnp.transpose(dw.reshape(k, k, Cin), (2, 0, 1))[:, None, :, :]
    z = jax.lax.conv_general_dilated(
        y_nchw, dw_oihw, (1, 1), [(k // 2, k // 2)] * 2,
        feature_group_count=Cin,
        dimension_numbers=("NCHW", "OIHW", "NCHW"),
        precision=jax.lax.Precision.HIGHEST)
    pw_oihw = jnp.transpose(pw, (1, 0))[:, :, None, None]
    z = jax.lax.conv_general_dilated(
        z, pw_oihw, (1, 1), "VALID",
        dimension_numbers=("NCHW", "OIHW", "NCHW"),
        precision=jax.lax.Precision.HIGHEST)
    mean = jnp.mean(z, axis=(0, 2, 3), keepdims=True)
    var = jnp.mean((z - mean) ** 2, axis=(0, 2, 3), keepdims=True)
    zhat = (z - mean) * jax.lax.rsqrt(var + BN_EPS)
    out = zhat * gamma.reshape(1, -1, 1, 1) + beta.reshape(1, -1, 1, 1)
    return jnp.maximum(out, 0.0)


def _ref_forward(x, indices, output_size, params, k):
    y = _ref_unpool(x, indices, output_size)
    for (dw, pw, gamma, beta) in params:
        y = _ref_block(y, dw, pw, gamma, beta, k)
    return y


if __name__ == "__main__":
    chin, chout, ksize = 4, 8, 3
    N, Hp, Wp = 2, 16, 16
    Ho, Wo = 2 * Hp, 2 * Wp

    key = jax.random.PRNGKey(0)
    kx, kdi, kdj, kp = jax.random.split(key, 4)

    x = jax.random.normal(kx, (N, chin, Hp, Wp), jnp.float32)

    # Deterministic "MaxPool2d(2, return_indices=True)"-style indices:
    # the argmax of each 2x2 cell, expressed as a flat index into the 32x32 plane.
    di = jax.random.randint(kdi, (N, chin, Hp, Wp), 0, 2)
    dj = jax.random.randint(kdj, (N, chin, Hp, Wp), 0, 2)
    rows = 2 * jnp.arange(Hp).reshape(1, 1, Hp, 1) + di
    cols = 2 * jnp.arange(Wp).reshape(1, 1, 1, Wp) + dj
    indices = (rows * Wo + cols).astype(jnp.int32)

    params = init_params(kp, chin, chout, ksize)

    out = up_ds_conv3_forward(x, indices, (Ho, Wo), params)
    out = jax.block_until_ready(out)
    assert out.shape == (N, chout, Ho, Wo), out.shape

    ref = jax.block_until_ready(_ref_forward(x, indices, (Ho, Wo), params, ksize))
    np.testing.assert_allclose(np.asarray(out), np.asarray(ref), rtol=2e-2, atol=2e-2)

    print("KERNEL_OK")
</pallas_src>

<mosaic_0001>
module attributes {stable_mosaic.version = 11 : i64} {
  func.func @fused_updsconv3_kernel(%arg0: memref<2x32x128xf32, #tpu.memory_space<vmem>>, %arg1: memref<3x128x128xf32, #tpu.memory_space<vmem>>, %arg2: memref<128x128xf32, #tpu.memory_space<vmem>>, %arg3: memref<1x128xf32, #tpu.memory_space<vmem>>, %arg4: memref<1x128xf32, #tpu.memory_space<vmem>>, %arg5: memref<3x128x128xf32, #tpu.memory_space<vmem>>, %arg6: memref<128x128xf32, #tpu.memory_space<vmem>>, %arg7: memref<1x128xf32, #tpu.memory_space<vmem>>, %arg8: memref<1x128xf32, #tpu.memory_space<vmem>>, %arg9: memref<3x128x256xf32, #tpu.memory_space<vmem>>, %arg10: memref<256x256xf32, #tpu.memory_space<vmem>>, %arg11: memref<1x256xf32, #tpu.memory_space<vmem>>, %arg12: memref<1x256xf32, #tpu.memory_space<vmem>>, %arg13: memref<2x32x256xf32, #tpu.memory_space<vmem>>, %arg14: memref<2x34x128xf32, #tpu.memory_space<vmem>>) attributes {dimension_semantics = [], scalar_prefetch = 0 : i64, scratch_operands = 1 : i64, tpu.core_type = #tpu.core_type<tc>} {
    %cst = arith.constant 0.000000e+00 : f32
    %0 = vector.broadcast %cst : f32 to vector<2x34x128xf32>
    %c0 = arith.constant 0 : index
    %c0_0 = arith.constant 0 : index
    %c0_1 = arith.constant 0 : index
    %1 = vector.load %arg14[%c0, %c0_0, %c0_1] : memref<2x34x128xf32, #tpu.memory_space<vmem>>, vector<2x34x128xf32>
    tpu.vector_store %arg14[%c0, %c0_0, %c0_1], %0 {strides = array<i32>} : memref<2x34x128xf32, #tpu.memory_space<vmem>>, vector<2x34x128xf32>,
    %c0_2 = arith.constant 0 : index
    %c0_3 = arith.constant 0 : index
    %c0_4 = arith.constant 0 : index
    %2 = vector.load %arg0[%c0_2, %c0_3, %c0_4] : memref<2x32x128xf32, #tpu.memory_space<vmem>>, vector<2x32x128xf32>
    %c0_5 = arith.constant 0 : index
    %c1 = arith.constant 1 : index
    %c0_6 = arith.constant 0 : index
    %3 = vector.load %arg14[%c0_5, %c1, %c0_6] : memref<2x34x128xf32, #tpu.memory_space<vmem>>, vector<2x32x128xf32>
    tpu.vector_store %arg14[%c0_5, %c1, %c0_6], %2 {strides = array<i32>} : memref<2x34x128xf32, #tpu.memory_space<vmem>>, vector<2x32x128xf32>,
    %cst_7 = arith.constant 0.000000e+00 : f32
    %4 = vector.broadcast %cst_7 : f32 to vector<64x128xf32>
    %c0_8 = arith.constant 0 : index
    %c0_9 = arith.constant 0 : index
    %c0_10 = arith.constant 0 : index
    %5 = vector.load %arg14[%c0_8, %c0_9, %c0_10] : memref<2x34x128xf32, #tpu.memory_space<vmem>>, vector<2x32x128xf32>
    %6 = vector.shape_cast %5 : vector<2x32x128xf32> to vector<64x128xf32>
    %c0_11 = arith.constant 0 : index
    %c0_12 = arith.constant 0 : index
    %c0_13 = arith.constant 0 : index
    %7 = vector.load %arg1[%c0_11, %c0_12, %c0_13] : memref<3x128x128xf32, #tpu.memory_space<vmem>>, vector<1x128x128xf32>
    %8 = vector.shape_cast %7 : vector<1x128x128xf32> to vector<128x128xf32>
    %cst_14 = arith.constant dense<0.000000e+00> : vector<64x128xf32>
    %9 = tpu.matmul %6, %8, %cst_14 {dimension_numbers = #tpu.dot_dimension_numbers<[1], [0], [0], [1], [0, 0, 1, 1], [], []>} : vector<64x128xf32>, vector<128x128xf32>, vector<64x128xf32> -> vector<64x128xf32>
    %10 = arith.addf %4, %9 : vector<64x128xf32>
    %c0_15 = arith.constant 0 : index
    %c1_16 = arith.constant 1 : index
    %c0_17 = arith.constant 0 : index
    %11 = vector.load %arg14[%c0_15, %c1_16, %c0_17] : memref<2x34x128xf32, #tpu.memory_space<vmem>>, vector<2x32x128xf32>
    %12 = vector.shape_cast %11 : vector<2x32x128xf32> to vector<64x128xf32>
    %c1_18 = arith.constant 1 : index
    %c0_19 = arith.constant 0 : index
    %c0_20 = arith.constant 0 : index
    %13 = vector.load %arg1[%c1_18, %c0_19, %c0_20] : memref<3x128x128xf32, #tpu.memory_space<vmem>>, vector<1x128x128xf32>
    %14 = vector.shape_cast %13 : vector<1x128x128xf32> to vector<128x128xf32>
    %cst_21 = arith.constant dense<0.000000e+00> : vector<64x128xf32>
    %15 = tpu.matmul %12, %14, %cst_21 {dimension_numbers = #tpu.dot_dimension_numbers<[1], [0], [0], [1], [0, 0, 1, 1], [], []>} : vector<64x128xf32>, vector<128x128xf32>, vector<64x128xf32> -> vector<64x128xf32>
    %16 = arith.addf %10, %15 : vector<64x128xf32>
    %c0_22 = arith.constant 0 : index
    %c2 = arith.constant 2 : index
    %c0_23 = arith.constant 0 : index
    %17 = vector.load %arg14[%c0_22, %c2, %c0_23] : memref<2x34x128xf32, #tpu.memory_space<vmem>>, vector<2x32x128xf32>
    %18 = vector.shape_cast %17 : vector<2x32x128xf32> to vector<64x128xf32>
    %c2_24 = arith.constant 2 : index
    %c0_25 = arith.constant 0 : index
    %c0_26 = arith.constant 0 : index
    %19 = vector.load %arg1[%c2_24, %c0_25, %c0_26] : memref<3x128x128xf32, #tpu.memory_space<vmem>>, vector<1x128x128xf32>
    %20 = vector.shape_cast %19 : vector<1x128x128xf32> to vector<128x128xf32>
    %cst_27 = arith.constant dense<0.000000e+00> : vector<64x128xf32>
    %21 = tpu.matmul %18, %20, %cst_27 {dimension_numbers = #tpu.dot_dimension_numbers<[1], [0], [0], [1], [0, 0, 1, 1], [], []>} : vector<64x128xf32>, vector<128x128xf32>, vector<64x128xf32> -> vector<64x128xf32>
    %22 = arith.addf %16, %21 : vector<64x128xf32>
    %cst_28 = arith.constant dense<0.000000e+00> : vector<128xf32>
    %23 = vector.multi_reduction <add>, %22, %cst_28 [0] : vector<64x128xf32> to vector<128xf32>
    %24 = vector.shape_cast %23 : vector<128xf32> to vector<1x128xf32>
    %25 = arith.mulf %22, %22 : vector<64x128xf32>
    %cst_29 = arith.constant dense<0.000000e+00> : vector<128xf32>
    %26 = vector.multi_reduction <add>, %25, %cst_29 [0] : vector<64x128xf32> to vector<128xf32>
    %27 = vector.shape_cast %26 : vector<128xf32> to vector<1x128xf32>
    %c0_30 = arith.constant 0 : index
    %c0_31 = arith.constant 0 : index
    %28 = vector.load %arg2[%c0_30, %c0_31] : memref<128x128xf32, #tpu.memory_space<vmem>>, vector<128x128xf32>
    %cst_32 = arith.constant dense<0.000000e+00> : vector<1x128xf32>
    %29 = tpu.matmul %24, %28, %cst_32 {dimension_numbers = #tpu.dot_dimension_numbers<[1], [0], [0], [1], [0, 0, 1, 1], [], []>} : vector<1x128xf32>, vector<128x128xf32>, vector<1x128xf32> -> vector<1x128xf32>
    %c0_33 = arith.constant 0 : index
    %c0_34 = arith.constant 0 : index
    %30 = vector.load %arg2[%c0_33, %c0_34] : memref<128x128xf32, #tpu.memory_space<vmem>>, vector<128x128xf32>
    %cst_35 = arith.constant dense<0.000000e+00> : vector<1x128xf32>
    %31 = tpu.matmul %27, %30, %cst_35 {dimension_numbers = #tpu.dot_dimension_numbers<[1], [0], [0], [1], [0, 0, 1, 1], [], []>} : vector<1x128xf32>, vector<128x128xf32>, vector<1x128xf32> -> vector<1x128xf32>
    %32 = arith.mulf %29, %29 : vector<1x128xf32>
    %33 = arith.subf %31, %32 : vector<1x128xf32>
    %cst_36 = arith.constant 0.000000e+00 : f32
    %34 = vector.broadcast %cst_36 : f32 to vector<1x128xf32>
    %35 = arith.maximumf %33, %34 : vector<1x128xf32>
    %c0_37 = arith.constant 0 : index
    %c0_38 = arith.constant 0 : index
    %36 = vector.load %arg3[%c0_37, %c0_38] : memref<1x128xf32, #tpu.memory_space<vmem>>, vector<1x128xf32>
    %cst_39 = arith.constant 9.99999974E-6 : f32
    %37 = vector.broadcast %cst_39 : f32 to vector<1x128xf32>
    %38 = arith.addf %35, %37 : vector<1x128xf32>
    %39 = math.rsqrt %38 : vector<1x128xf32>
    %40 = arith.mulf %36, %39 : vector<1x128xf32>
    %c0_40 = arith.constant 0 : index
    %c0_41 = arith.constant 0 : index
    %41 = vector.load %arg4[%c0_40, %c0_41] : memref<1x128xf32, #tpu.memory_space<vmem>>, vector<1x128xf32>
    %42 = arith.mulf %29, %40 : vector<1x128xf32>
    %43 = arith.subf %41, %42 : vector<1x128xf32>
    %44 = vector.broadcast %40 : vector<1x128xf32> to vector<64x128xf32>
    %45 = arith.mulf %22, %44 : vector<64x128xf32>
    %46 = vector.broadcast %43 : vector<1x128xf32> to vector<64x128xf32>
    %47 = arith.addf %45, %46 : vector<64x128xf32>
    %cst_42 = arith.constant 0.000000e+00 : f32
    %48 = vector.broadcast %cst_42 : f32 to vector<64x128xf32>
    %49 = arith.maximumf %47, %48 : vector<64x128xf32>
    %50 = vector.shape_cast %49 : vector<64x128xf32> to vector<2x32x128xf32>
    %c0_43 = arith.constant 0 : index
    %c1_44 = arith.constant 1 : index
    %c0_45 = arith.constant 0 : index
    %51 = vector.load %arg14[%c0_43, %c1_44, %c0_45] : memref<2x34x128xf32, #tpu.memory_space<vmem>>, vector<2x32x128xf32>
    tpu.vector_store %arg14[%c0_43, %c1_44, %c0_45], %50 {strides = array<i32>} : memref<2x34x128xf32, #tpu.memory_space<vmem>>, vector<2x32x128xf32>,
    %cst_46 = arith.constant 0.000000e+00 : f32
    %52 = vector.broadcast %cst_46 : f32 to vector<64x128xf32>
    %c0_47 = arith.constant 0 : index
    %c0_48 = arith.constant 0 : index
    %c0_49 = arith.constant 0 : index
    %53 = vector.load %arg14[%c0_47, %c0_48, %c0_49] : memref<2x34x128xf32, #tpu.memory_space<vmem>>, vector<2x32x128xf32>
    %54 = vector.shape_cast %53 : vector<2x32x128xf32> to vector<64x128xf32>
    %c0_50 = arith.constant 0 : index
    %c0_51 = arith.constant 0 : index
    %c0_52 = arith.constant 0 : index
    %55 = vector.load %arg5[%c0_50, %c0_51, %c0_52] : memref<3x128x128xf32, #tpu.memory_space<vmem>>, vector<1x128x128xf32>
    %56 = vector.shape_cast %55 : vector<1x128x128xf32> to vector<128x128xf32>
    %cst_53 = arith.constant dense<0.000000e+00> : vector<64x128xf32>
    %57 = tpu.matmul %54, %56, %cst_53 {dimension_numbers = #tpu.dot_dimension_numbers<[1], [0], [0], [1], [0, 0, 1, 1], [], []>} : vector<64x128xf32>, vector<128x128xf32>, vector<64x128xf32> -> vector<64x128xf32>
    %58 = arith.addf %52, %57 : vector<64x128xf32>
    %c0_54 = arith.constant 0 : index
    %c1_55 = arith.constant 1 : index
    %c0_56 = arith.constant 0 : index
    %59 = vector.load %arg14[%c0_54, %c1_55, %c0_56] : memref<2x34x128xf32, #tpu.memory_space<vmem>>, vector<2x32x128xf32>
    %60 = vector.shape_cast %59 : vector<2x32x128xf32> to vector<64x128xf32>
    %c1_57 = arith.constant 1 : index
    %c0_58 = arith.constant 0 : index
    %c0_59 = arith.constant 0 : index
    %61 = vector.load %arg5[%c1_57, %c0_58, %c0_59] : memref<3x128x128xf32, #tpu.memory_space<vmem>>, vector<1x128x128xf32>
    %62 = vector.shape_cast %61 : vector<1x128x128xf32> to vector<128x128xf32>
    %cst_60 = arith.constant dense<0.000000e+00> : vector<64x128xf32>
    %63 = tpu.matmul %60, %62, %cst_60 {dimension_numbers = #tpu.dot_dimension_numbers<[1], [0], [0], [1], [0, 0, 1, 1], [], []>} : vector<64x128xf32>, vector<128x128xf32>, vector<64x128xf32> -> vector<64x128xf32>
    %64 = arith.addf %58, %63 : vector<64x128xf32>
    %c0_61 = arith.constant 0 : index
    %c2_62 = arith.constant 2 : index
    %c0_63 = arith.constant 0 : index
    %65 = vector.load %arg14[%c0_61, %c2_62, %c0_63] : memref<2x34x128xf32, #tpu.memory_space<vmem>>, vector<2x32x128xf32>
    %66 = vector.shape_cast %65 : vector<2x32x128xf32> to vector<64x128xf32>
    %c2_64 = arith.constant 2 : index
    %c0_65 = arith.constant 0 : index
    %c0_66 = arith.constant 0 : index
    %67 = vector.load %arg5[%c2_64, %c0_65, %c0_66] : memref<3x128x128xf32, #tpu.memory_space<vmem>>, vector<1x128x128xf32>
    %68 = vector.shape_cast %67 : vector<1x128x128xf32> to vector<128x128xf32>
    %cst_67 = arith.constant dense<0.000000e+00> : vector<64x128xf32>
    %69 = tpu.matmul %66, %68, %cst_67 {dimension_numbers = #tpu.dot_dimension_numbers<[1], [0], [0], [1], [0, 0, 1, 1], [], []>} : vector<64x128xf32>, vector<128x128xf32>, vector<64x128xf32> -> vector<64x128xf32>
    %70 = arith.addf %64, %69 : vector<64x128xf32>
    %cst_68 = arith.constant dense<0.000000e+00> : vector<128xf32>
    %71 = vector.multi_reduction <add>, %70, %cst_68 [0] : vector<64x128xf32> to vector<128xf32>
    %72 = vector.shape_cast %71 : vector<128xf32> to vector<1x128xf32>
    %73 = arith.mulf %70, %70 : vector<64x128xf32>
    %cst_69 = arith.constant dense<0.000000e+00> : vector<128xf32>
    %74 = vector.multi_reduction <add>, %73, %cst_69 [0] : vector<64x128xf32> to vector<128xf32>
    %75 = vector.shape_cast %74 : vector<128xf32> to vector<1x128xf32>
    %c0_70 = arith.constant 0 : index
    %c0_71 = arith.constant 0 : index
    %76 = vector.load %arg6[%c0_70, %c0_71] : memref<128x128xf32, #tpu.memory_space<vmem>>, vector<128x128xf32>
    %cst_72 = arith.constant dense<0.000000e+00> : vector<1x128xf32>
    %77 = tpu.matmul %72, %76, %cst_72 {dimension_numbers = #tpu.dot_dimension_numbers<[1], [0], [0], [1], [0, 0, 1, 1], [], []>} : vector<1x128xf32>, vector<128x128xf32>, vector<1x128xf32> -> vector<1x128xf32>
    %c0_73 = arith.constant 0 : index
    %c0_74 = arith.constant 0 : index
    %78 = vector.load %arg6[%c0_73, %c0_74] : memref<128x128xf32, #tpu.memory_space<vmem>>, vector<128x128xf32>
    %cst_75 = arith.constant dense<0.000000e+00> : vector<1x128xf32>
    %79 = tpu.matmul %75, %78, %cst_75 {dimension_numbers = #tpu.dot_dimension_numbers<[1], [0], [0], [1], [0, 0, 1, 1], [], []>} : vector<1x128xf32>, vector<128x128xf32>, vector<1x128xf32> -> vector<1x128xf32>
    %80 = arith.mulf %77, %77 : vector<1x128xf32>
    %81 = arith.subf %79, %80 : vector<1x128xf32>
    %cst_76 = arith.constant 0.000000e+00 : f32
    %82 = vector.broadcast %cst_76 : f32 to vector<1x128xf32>
    %83 = arith.maximumf %81, %82 : vector<1x128xf32>
    %c0_77 = arith.constant 0 : index
    %c0_78 = arith.constant 0 : index
    %84 = vector.load %arg7[%c0_77, %c0_78] : memref<1x128xf32, #tpu.memory_space<vmem>>, vector<1x128xf32>
    %cst_79 = arith.constant 9.99999974E-6 : f32
    %85 = vector.broadcast %cst_79 : f32 to vector<1x128xf32>
    %86 = arith.addf %83, %85 : vector<1x128xf32>
    %87 = math.rsqrt %86 : vector<1x128xf32>
    %88 = arith.mulf %84, %87 : vector<1x128xf32>
    %c0_80 = arith.constant 0 : index
    %c0_81 = arith.constant 0 : index
    %89 = vector.load %arg8[%c0_80, %c0_81] : memref<1x128xf32, #tpu.memory_space<vmem>>, vector<1x128xf32>
    %90 = arith.mulf %77, %88 : vector<1x128xf32>
    %91 = arith.subf %89, %90 : vector<1x128xf32>
    %92 = vector.broadcast %88 : vector<1x128xf32> to vector<64x128xf32>
    %93 = arith.mulf %70, %92 : vector<64x128xf32>
    %94 = vector.broadcast %91 : vector<1x128xf32> to vector<64x128xf32>
    %95 = arith.addf %93, %94 : vector<64x128xf32>
    %cst_82 = arith.constant 0.000000e+00 : f32
    %96 = vector.broadcast %cst_82 : f32 to vector<64x128xf32>
    %97 = arith.maximumf %95, %96 : vector<64x128xf32>
    %98 = vector.shape_cast %97 : vector<64x128xf32> to vector<2x32x128xf32>
    %c0_83 = arith.constant 0 : index
    %c1_84 = arith.constant 1 : index
    %c0_85 = arith.constant 0 : index
    %99 = vector.load %arg14[%c0_83, %c1_84, %c0_85] : memref<2x34x128xf32, #tpu.memory_space<vmem>>, vector<2x32x128xf32>
    tpu.vector_store %arg14[%c0_83, %c1_84, %c0_85], %98 {strides = array<i32>} : memref<2x34x128xf32, #tpu.memory_space<vmem>>, vector<2x32x128xf32>,
    %cst_86 = arith.constant 0.000000e+00 : f32
    %100 = vector.broadcast %cst_86 : f32 to vector<64x256xf32>
    %c0_87 = arith.constant 0 : index
    %c0_88 = arith.constant 0 : index
    %c0_89 = arith.constant 0 : index
    %101 = vector.load %arg14[%c0_87, %c0_88, %c0_89] : memref<2x34x128xf32, #tpu.memory_space<vmem>>, vector<2x32x128xf32>
    %102 = vector.shape_cast %101 : vector<2x32x128xf32> to vector<64x128xf32>
    %c0_90 = arith.constant 0 : index
    %c0_91 = arith.constant 0 : index
    %c0_92 = arith.constant 0 : index
    %103 = vector.load %arg9[%c0_90, %c0_91, %c0_92] : memref<3x128x256xf32, #tpu.memory_space<vmem>>, vector<1x128x256xf32>
    %104 = vector.shape_cast %103 : vector<1x128x256xf32> to vector<128x256xf32>
    %cst_93 = arith.constant dense<0.000000e+00> : vector<64x256xf32>
    %105 = tpu.matmul %102, %104, %cst_93 {dimension_numbers = #tpu.dot_dimension_numbers<[1], [0], [0], [1], [0, 0, 1, 1], [], []>} : vector<64x128xf32>, vector<128x256xf32>, vector<64x256xf32> -> vector<64x256xf32>
    %106 = arith.addf %100, %105 : vector<64x256xf32>
    %c0_94 = arith.constant 0 : index
    %c1_95 = arith.constant 1 : index
    %c0_96 = arith.constant 0 : index
    %107 = vector.load %arg14[%c0_94, %c1_95, %c0_96] : memref<2x34x128xf32, #tpu.memory_space<vmem>>, vector<2x32x128xf32>
    %108 = vector.shape_cast %107 : vector<2x32x128xf32> to vector<64x128xf32>
    %c1_97 = arith.constant 1 : index
    %c0_98 = arith.constant 0 : index
    %c0_99 = arith.constant 0 : index
    %109 = vector.load %arg9[%c1_97, %c0_98, %c0_99] : memref<3x128x256xf32, #tpu.memory_space<vmem>>, vector<1x128x256xf32>
    %110 = vector.shape_cast %109 : vector<1x128x256xf32> to vector<128x256xf32>
    %cst_100 = arith.constant dense<0.000000e+00> : vector<64x256xf32>
    %111 = tpu.matmul %108, %110, %cst_100 {dimension_numbers = #tpu.dot_dimension_numbers<[1], [0], [0], [1], [0, 0, 1, 1], [], []>} : vector<64x128xf32>, vector<128x256xf32>, vector<64x256xf32> -> vector<64x256xf32>
    %112 = arith.addf %106, %111 : vector<64x256xf32>
    %c0_101 = arith.constant 0 : index
    %c2_102 = arith.constant 2 : index
    %c0_103 = arith.constant 0 : index
    %113 = vector.load %arg14[%c0_101, %c2_102, %c0_103] : memref<2x34x128xf32, #tpu.memory_space<vmem>>, vector<2x32x128xf32>
    %114 = vector.shape_cast %113 : vector<2x32x128xf32> to vector<64x128xf32>
    %c2_104 = arith.constant 2 : index
    %c0_105 = arith.constant 0 : index
    %c0_106 = arith.constant 0 : index
    %115 = vector.load %arg9[%c2_104, %c0_105, %c0_106] : memref<3x128x256xf32, #tpu.memory_space<vmem>>, vector<1x128x256xf32>
    %116 = vector.shape_cast %115 : vector<1x128x256xf32> to vector<128x256xf32>
    %cst_107 = arith.constant dense<0.000000e+00> : vector<64x256xf32>
    %117 = tpu.matmul %114, %116, %cst_107 {dimension_numbers = #tpu.dot_dimension_numbers<[1], [0], [0], [1], [0, 0, 1, 1], [], []>} : vector<64x128xf32>, vector<128x256xf32>, vector<64x256xf32> -> vector<64x256xf32>
    %118 = arith.addf %112, %117 : vector<64x256xf32>
    %cst_108 = arith.constant dense<0.000000e+00> : vector<256xf32>
    %119 = vector.multi_reduction <add>, %118, %cst_108 [0] : vector<64x256xf32> to vector<256xf32>
    %120 = vector.shape_cast %119 : vector<256xf32> to vector<1x256xf32>
    %121 = arith.mulf %118, %118 : vector<64x256xf32>
    %cst_109 = arith.constant dense<0.000000e+00> : vector<256xf32>
    %122 = vector.multi_reduction <add>, %121, %cst_109 [0] : vector<64x256xf32> to vector<256xf32>
    %123 = vector.shape_cast %122 : vector<256xf32> to vector<1x256xf32>
    %c0_110 = arith.constant 0 : index
    %c0_111 = arith.constant 0 : index
    %124 = vector.load %arg10[%c0_110, %c0_111] : memref<256x256xf32, #tpu.memory_space<vmem>>, vector<256x256xf32>
    %cst_112 = arith.constant dense<0.000000e+00> : vector<1x256xf32>
    %125 = tpu.matmul %120, %124, %cst_112 {dimension_numbers = #tpu.dot_dimension_numbers<[1], [0], [0], [1], [0, 0, 1, 1], [], []>} : vector<1x256xf32>, vector<256x256xf32>, vector<1x256xf32> -> vector<1x256xf32>
    %c0_113 = arith.constant 0 : index
    %c0_114 = arith.constant 0 : index
    %126 = vector.load %arg10[%c0_113, %c0_114] : memref<256x256xf32, #tpu.memory_space<vmem>>, vector<256x256xf32>
    %cst_115 = arith.constant dense<0.000000e+00> : vector<1x256xf32>
    %127 = tpu.matmul %123, %126, %cst_115 {dimension_numbers = #tpu.dot_dimension_numbers<[1], [0], [0], [1], [0, 0, 1, 1], [], []>} : vector<1x256xf32>, vector<256x256xf32>, vector<1x256xf32> -> vector<1x256xf32>
    %128 = arith.mulf %125, %125 : vector<1x256xf32>
    %129 = arith.subf %127, %128 : vector<1x256xf32>
    %cst_116 = arith.constant 0.000000e+00 : f32
    %130 = vector.broadcast %cst_116 : f32 to vector<1x256xf32>
    %131 = arith.maximumf %129, %130 : vector<1x256xf32>
    %c0_117 = arith.constant 0 : index
    %c0_118 = arith.constant 0 : index
    %132 = vector.load %arg11[%c0_117, %c0_118] : memref<1x256xf32, #tpu.memory_space<vmem>>, vector<1x256xf32>
    %cst_119 = arith.constant 9.99999974E-6 : f32
    %133 = vector.broadcast %cst_119 : f32 to vector<1x256xf32>
    %134 = arith.addf %131, %133 : vector<1x256xf32>
    %135 = math.rsqrt %134 : vector<1x256xf32>
    %136 = arith.mulf %132, %135 : vector<1x256xf32>
    %c0_120 = arith.constant 0 : index
    %c0_121 = arith.constant 0 : index
    %137 = vector.load %arg12[%c0_120, %c0_121] : memref<1x256xf32, #tpu.memory_space<vmem>>, vector<1x256xf32>
    %138 = arith.mulf %125, %136 : vector<1x256xf32>
    %139 = arith.subf %137, %138 : vector<1x256xf32>
    %140 = vector.broadcast %136 : vector<1x256xf32> to vector<64x256xf32>
    %141 = arith.mulf %118, %140 : vector<64x256xf32>
    %142 = vector.broadcast %139 : vector<1x256xf32> to vector<64x256xf32>
    %143 = arith.addf %141, %142 : vector<64x256xf32>
    %cst_122 = arith.constant 0.000000e+00 : f32
    %144 = vector.broadcast %cst_122 : f32 to vector<64x256xf32>
    %145 = arith.maximumf %143, %144 : vector<64x256xf32>
    %146 = vector.shape_cast %145 : vector<64x256xf32> to vector<2x32x256xf32>
    %c0_123 = arith.constant 0 : index
    %c0_124 = arith.constant 0 : index
    %c0_125 = arith.constant 0 : index
    %147 = vector.load %arg13[%c0_123, %c0_124, %c0_125] : memref<2x32x256xf32, #tpu.memory_space<vmem>>, vector<2x32x256xf32>
    tpu.vector_store %arg13[%c0_123, %c0_124, %c0_125], %146 {strides = array<i32>} : memref<2x32x256xf32, #tpu.memory_space<vmem>>, vector<2x32x256xf32>,
    return
  }
}

</mosaic_0001>

<llo_original>
// kernel: tpu_custom_call.1
$region0: #{tpu_custom_call.1}
  #allocation0 [shape = 'u32[]', space=smem, size = 0x4, offset = 0x4, fixed_abs, tag = 'smem constant byte address 0x4 - core index']
  #allocation1 [shape = 'u32[72,128]{1,0:T(1,128)}', space=vmem, size = 0x9000, scoped, tag = 'internal scratch']
  #allocation2 [shape = 'f32[2,34,128]{2,1,0:T(8,128)}', space=vmem, size = 0xa000, scoped, tag = 'scratch operand']
  %s0 = inlined_call_operand.hbm [shape: f32[2,32,128], index: 0, kind: input, shape index: {}]
  %s1 = inlined_call_operand.hbm [shape: f32[3,128,128], index: 1, kind: input, shape index: {}]
  %s2 = inlined_call_operand.hbm [shape: f32[128,128], index: 2, kind: input, shape index: {}]
  %s3 = inlined_call_operand.hbm [shape: f32[1,128], index: 3, kind: input, shape index: {}]
  %s4 = inlined_call_operand.hbm [shape: f32[1,128], index: 4, kind: input, shape index: {}]
  %s5 = inlined_call_operand.hbm [shape: f32[3,128,128], index: 5, kind: input, shape index: {}]
  %s6 = inlined_call_operand.hbm [shape: f32[128,128], index: 6, kind: input, shape index: {}]
  %s7 = inlined_call_operand.vmem [shape: f32[1,128], index: 7, kind: input, shape index: {}]
  %s8 = inlined_call_operand.vmem [shape: f32[1,128], index: 8, kind: input, shape index: {}]
  %s9 = inlined_call_operand.hbm [shape: f32[3,128,256], index: 9, kind: input, shape index: {}]
  %s10 = inlined_call_operand.hbm [shape: f32[256,256], index: 10, kind: input, shape index: {}]
  %s11 = inlined_call_operand.vmem [shape: f32[1,256], index: 11, kind: input, shape index: {}]
  %s12 = inlined_call_operand.vmem [shape: f32[1,256], index: 12, kind: input, shape index: {}]
  %s13 = inlined_call_operand.hbm [shape: f32[2,32,256], index: 13, kind: output, shape index: {}]
  %s14 = sld [smem:[#allocation0]]
  $region98: #{tpu_custom_call.1} parent=0
    _
  %s16 = ssub.s32 1, %s14
  %s17 = scalar_select 0, %s16, %s14
  $region1: #{tpu_custom_call.1} parent=0
    #allocation3 [shape = 'u8[32768]{0}', space=vmem, size = 0x8000, scoped, tag = 'input window, operand 0, single buffered']
    #allocation4 [shape = 's32[1]{0}', space=sflag, size = 0x4, scoped, tag = 'scoped memory for tpu_custom_call.1']
    #allocation5 [shape = 's32[1]{0}', space=sflag, size = 0x4, scoped, tag = 'scoped memory for tpu_custom_call.1']
    #allocation6 [shape = 'u8[196608]{0}', space=vmem, size = 0x30000, scoped, tag = 'input window, operand 1, single buffered']
    #allocation7 [shape = 's32[1]{0}', space=sflag, size = 0x4, scoped, tag = 'scoped memory for tpu_custom_call.1']
    #allocation8 [shape = 'u8[65536]{0}', space=vmem, size = 0x10000, scoped, tag = 'input window, operand 2, single buffered']
    #allocation9 [shape = 'u8[512]{0}', space=vmem, size = 0x400, scoped, tag = 'input window, operand 3, single buffered']
    #allocation10 [shape = 's32[1]{0}', space=sflag, size = 0x4, scoped, tag = 'scoped memory for tpu_custom_call.1']
    #allocation11 [shape = 'u8[512]{0}', space=vmem, size = 0x400, scoped, tag = 'input window, operand 4, single buffered']
    #allocation12 [shape = 'u8[196608]{0}', space=vmem, size = 0x30000, scoped, tag = 'input window, operand 5, single buffered']
    #allocation13 [shape = 's32[1]{0}', space=sflag, size = 0x4, scoped, tag = 'scoped memory for tpu_custom_call.1']
    #allocation14 [shape = 'u8[65536]{0}', space=vmem, size = 0x10000, scoped, tag = 'input window, operand 6, single buffered']
    #allocation15 [shape = 'u8[393216]{0}', space=vmem, size = 0x60000, scoped, tag = 'input window, operand 9, single buffered']
    #allocation16 [shape = 's32[1]{0}', space=sflag, size = 0x4, scoped, tag = 'scoped memory for tpu_custom_call.1']
    #allocation17 [shape = 'u8[262144]{0}', space=vmem, size = 0x40000, scoped, tag = 'input window, operand 10, single buffered']
    #allocation18 [shape = 'u8[65536]{0}', space=vmem, size = 0x10000, scoped, tag = 'output window, operand 0, single buffered']
    %18 = vsyncpa [#allocation4], 0
    %19 = vsyncpa [#allocation7], 0
    %20 = vsyncpa [#allocation10], 0
    %21 = vsyncpa [#allocation13], 0
    %22 = vsyncpa [#allocation16], 0
    %23 = vsyncpa [#allocation5], 0
    // Predicated region
    $region2: #{tpu_custom_call.1} parent=1 // pred_check
      _
    $region3: #{tpu_custom_call.1} parent=1 // pred_check_branch
      %25 = sbr.rel (0) target = $region5
    $region4: #{tpu_custom_call.1} parent=1 // pred_region
      %27 = vsyncadd [#allocation4], 0
      %s28 = sshll.u32 %s0, 4
      %s29 = int_to_ptr.hbm [resolvable:$true] %s28
      %s30 = sshll.u32 [#allocation3], 4
      %s31 = int_to_ptr.vmem [resolvable:$true] %s30
      %36 = dma.hbm_to_vmem [thread:$0]  %s29, 1024, %s31, [#allocation4], 128, 128, 8
    $region5: #{tpu_custom_call.1} parent=1 // pred_fallthru
      _
    // Predicated region
    $region6: #{tpu_custom_call.1} parent=1 // pred_check
      _
    $region7: #{tpu_custom_call.1} parent=1 // pred_check_branch
      %38 = sbr.rel (0) target = $region9
    $region8: #{tpu_custom_call.1} parent=1 // pred_region
      %40 = vsyncadd [#allocation7], 0
      %s41 = sshll.u32 %s1, 4
      %s42 = int_to_ptr.hbm [resolvable:$true] %s41
      %s43 = sshll.u32 [#allocation6], 4
      %s44 = int_to_ptr.vmem [resolvable:$true] %s43
      %49 = dma.hbm_to_vmem [thread:$0]  %s42, 6144, %s44, [#allocation7], 128, 128, 8
    $region9: #{tpu_custom_call.1} parent=1 // pred_fallthru
      _
    // Predicated region
    $region10: #{tpu_custom_call.1} parent=1 // pred_check
      _
    $region11: #{tpu_custom_call.1} parent=1 // pred_check_branch
      %51 = sbr.rel (0) target = $region13
    $region12: #{tpu_custom_call.1} parent=1 // pred_region
      %53 = vsyncadd [#allocation7], 0
      %s54 = sshll.u32 %s2, 4
      %s55 = int_to_ptr.hbm [resolvable:$true] %s54
      %s56 = sshll.u32 [#allocation8], 4
      %s57 = int_to_ptr.vmem [resolvable:$true] %s56
      %62 = dma.hbm_to_vmem [thread:$0]  %s55, 2048, %s57, [#allocation7], 128, 128, 8
    $region13: #{tpu_custom_call.1} parent=1 // pred_fallthru
      _
    // Predicated region
    $region14: #{tpu_custom_call.1} parent=1 // pred_check
      _
    $region15: #{tpu_custom_call.1} parent=1 // pred_check_branch
      %64 = sbr.rel (0) target = $region17
    $region16: #{tpu_custom_call.1} parent=1 // pred_region
      %66 = vsyncadd [#allocation10], 0
      %s68 = sshll.u32 %s3, 4
      %s69 = int_to_ptr.hbm [resolvable:$true] %s68
      %s70 = sshll.u32 [#allocation9], 4
      %s71 = int_to_ptr.vmem [resolvable:$true] %s70
      %73 = dma.hbm_to_vmem [thread:$0]  %s69, 16, %s71, [#allocation10]
    $region17: #{tpu_custom_call.1} parent=1 // pred_fallthru
      _
    // Predicated region
    $region18: #{tpu_custom_call.1} parent=1 // pred_check
      _
    $region19: #{tpu_custom_call.1} parent=1 // pred_check_branch
      %75 = sbr.rel (0) target = $region21
    $region20: #{tpu_custom_call.1} parent=1 // pred_region
      %77 = vsyncadd [#allocation10], 0
      %s79 = sshll.u32 %s4, 4
      %s80 = int_to_ptr.hbm [resolvable:$true] %s79
      %s81 = sshll.u32 [#allocation11], 4
      %s82 = int_to_ptr.vmem [resolvable:$true] %s81
      %84 = dma.hbm_to_vmem [thread:$0]  %s80, 16, %s82, [#allocation10]
    $region21: #{tpu_custom_call.1} parent=1 // pred_fallthru
      _
    // Predicated region
    $region22: #{tpu_custom_call.1} parent=1 // pred_check
      _
    $region23: #{tpu_custom_call.1} parent=1 // pred_check_branch
      %86 = sbr.rel (0) target = $region25
    $region24: #{tpu_custom_call.1} parent=1 // pred_region
      %88 = vsyncadd [#allocation13], 0
      %s89 = sshll.u32 %s5, 4
      %s90 = int_to_ptr.hbm [resolvable:$true] %s89
      %s91 = sshll.u32 [#allocation12], 4
      %s92 = int_to_ptr.vmem [resolvable:$true] %s91
      %97 = dma.hbm_to_vmem [thread:$0]  %s90, 6144, %s92, [#allocation13], 128, 128, 8
    $region25: #{tpu_custom_call.1} parent=1 // pred_fallthru
      _
    // Predicated region
    $region26: #{tpu_custom_call.1} parent=1 // pred_check
      _
    $region27: #{tpu_custom_call.1} parent=1 // pred_check_branch
      %99 = sbr.rel (0) target = $region29
    $region28: #{tpu_custom_call.1} parent=1 // pred_region
      %101 = vsyncadd [#allocation13], 0
      %s102 = sshll.u32 %s6, 4
      %s103 = int_to_ptr.hbm [resolvable:$true] %s102
      %s104 = sshll.u32 [#allocation14], 4
      %s105 = int_to_ptr.vmem [resolvable:$true] %s104
      %110 = dma.hbm_to_vmem [thread:$0]  %s103, 2048, %s105, [#allocation13], 128, 128, 8
    $region29: #{tpu_custom_call.1} parent=1 // pred_fallthru
      _
    // Predicated region
    $region30: #{tpu_custom_call.1} parent=1 // pred_check
      _
    $region31: #{tpu_custom_call.1} parent=1 // pred_check_branch
      %112 = sbr.rel (0) target = $region33
    $region32: #{tpu_custom_call.1} parent=1 // pred_region
      _
    $region33: #{tpu_custom_call.1} parent=1 // pred_fallthru
      _
    // Predicated region
    $region34: #{tpu_custom_call.1} parent=1 // pred_check
      _
    $region35: #{tpu_custom_call.1} parent=1 // pred_check_branch
      %114 = sbr.rel (0) target = $region37
    $region36: #{tpu_custom_call.1} parent=1 // pred_region
      _
    $region37: #{tpu_custom_call.1} parent=1 // pred_fallthru
      _
    // Predicated region
    $region38: #{tpu_custom_call.1} parent=1 // pred_check
      _
    $region39: #{tpu_custom_call.1} parent=1 // pred_check_branch
      %116 = sbr.rel (0) target = $region41
    $region40: #{tpu_custom_call.1} parent=1 // pred_region
      %118 = vsyncadd [#allocation16], 0
      %s119 = sshll.u32 %s9, 4
      %s120 = int_to_ptr.hbm [resolvable:$true] %s119
      %s121 = sshll.u32 [#allocation15], 4
      %s122 = int_to_ptr.vmem [resolvable:$true] %s121
      %127 = dma.hbm_to_vmem [thread:$0]  %s120, 12288, %s122, [#allocation16], 256, 256, 16
    $region41: #{tpu_custom_call.1} parent=1 // pred_fallthru
      _
    // Predicated region
    $region42: #{tpu_custom_call.1} parent=1 // pred_check
      _
    $region43: #{tpu_custom_call.1} parent=1 // pred_check_branch
      %129 = sbr.rel (0) target = $region45
    $region44: #{tpu_custom_call.1} parent=1 // pred_region
      %131 = vsyncadd [#allocation16], 0
      %s132 = sshll.u32 %s10, 4
      %s133 = int_to_ptr.hbm [resolvable:$true] %s132
      %s134 = sshll.u32 [#allocation17], 4
      %s135 = int_to_ptr.vmem [resolvable:$true] %s134
      %140 = dma.hbm_to_vmem [thread:$0]  %s133, 8192, %s135, [#allocation16], 256, 256, 16
    $region45: #{tpu_custom_call.1} parent=1 // pred_fallthru
      _
    // Predicated region
    $region46: #{tpu_custom_call.1} parent=1 // pred_check
      _
    $region47: #{tpu_custom_call.1} parent=1 // pred_check_branch
      %142 = sbr.rel (0) target = $region49
    $region48: #{tpu_custom_call.1} parent=1 // pred_region
      _
    $region49: #{tpu_custom_call.1} parent=1 // pred_fallthru
      _
    // Predicated region
    $region50: #{tpu_custom_call.1} parent=1 // pred_check
      _
    $region51: #{tpu_custom_call.1} parent=1 // pred_check_branch
      %144 = sbr.rel (0) target = $region53
    $region52: #{tpu_custom_call.1} parent=1 // pred_region
      _
    $region53: #{tpu_custom_call.1} parent=1 // pred_fallthru
      _
    // Predicated region
    $region54: #{tpu_custom_call.1} parent=1 // pred_check
      _
    $region55: #{tpu_custom_call.1} parent=1 // pred_check_branch
      %146 = sbr.rel (0) target = $region57
    $region56: #{tpu_custom_call.1} parent=1 // pred_region
      %148 = dma.done [#allocation4], 1024
    $region57: #{tpu_custom_call.1} parent=1 // pred_fallthru
      _
    // Predicated region
    $region58: #{tpu_custom_call.1} parent=1 // pred_check
      _
    $region59: #{tpu_custom_call.1} parent=1 // pred_check_branch
      %150 = sbr.rel (0) target = $region61
    $region60: #{tpu_custom_call.1} parent=1 // pred_region
      %152 = dma.done [#allocation7], 6144
    $region61: #{tpu_custom_call.1} parent=1 // pred_fallthru
      _
    // Predicated region
    $region62: #{tpu_custom_call.1} parent=1 // pred_check
      _
    $region63: #{tpu_custom_call.1} parent=1 // pred_check_branch
      %154 = sbr.rel (0) target = $region65
    $region64: #{tpu_custom_call.1} parent=1 // pred_region
      %156 = dma.done [#allocation7], 2048
    $region65: #{tpu_custom_call.1} parent=1 // pred_fallthru
      _
    // Predicated region
    $region66: #{tpu_custom_call.1} parent=1 // pred_check
      _
    $region67: #{tpu_custom_call.1} parent=1 // pred_check_branch
      %158 = sbr.rel (0) target = $region69
    $region68: #{tpu_custom_call.1} parent=1 // pred_region
      %160 = dma.done [#allocation10], 16
    $region69: #{tpu_custom_call.1} parent=1 // pred_fallthru
      _
    // Predicated region
    $region70: #{tpu_custom_call.1} parent=1 // pred_check
      _
    $region71: #{tpu_custom_call.1} parent=1 // pred_check_branch
      %162 = sbr.rel (0) target = $region73
    $region72: #{tpu_custom_call.1} parent=1 // pred_region
      %164 = dma.done [#allocation10], 16
    $region73: #{tpu_custom_call.1} parent=1 // pred_fallthru
      _
    // Predicated region
    $region74: #{tpu_custom_call.1} parent=1 // pred_check
      _
    $region75: #{tpu_custom_call.1} parent=1 // pred_check_branch
      %166 = sbr.rel (0) target = $region77
    $region76: #{tpu_custom_call.1} parent=1 // pred_region
      %168 = dma.done [#allocation13], 6144
    $region77: #{tpu_custom_call.1} parent=1 // pred_fallthru
      _
    // Predicated region
    $region78: #{tpu_custom_call.1} parent=1 // pred_check
      _
    $region79: #{tpu_custom_call.1} parent=1 // pred_check_branch
      %170 = sbr.rel (0) target = $region81
    $region80: #{tpu_custom_call.1} parent=1 // pred_region
      %172 = dma.done [#allocation13], 2048
    $region81: #{tpu_custom_call.1} parent=1 // pred_fallthru
      _
    // Predicated region
    $region82: #{tpu_custom_call.1} parent=1 // pred_check
      _
    $region83: #{tpu_custom_call.1} parent=1 // pred_check_branch
      %174 = sbr.rel (0) target = $region85
    $region84: #{tpu_custom_call.1} parent=1 // pred_region
      %176 = dma.done [#allocation16], 12288
    $region85: #{tpu_custom_call.1} parent=1 // pred_fallthru
      _
    // Predicated region
    $region86: #{tpu_custom_call.1} parent=1 // pred_check
      _
    $region87: #{tpu_custom_call.1} parent=1 // pred_check_branch
      %178 = sbr.rel (0) target = $region89
    $region88: #{tpu_custom_call.1} parent=1 // pred_region
      %180 = dma.done [#allocation16], 8192
    $region89: #{tpu_custom_call.1} parent=1 // pred_fallthru
      _
    %181 = vst [vmem:[#allocation2] sm:$0xff] 0.0
    %182 = vst [vmem:[#allocation2 + $0x8] sm:$0xff] 0.0
    %183 = vst [vmem:[#allocation2 + $0x10] sm:$0xff] 0.0
    %184 = vst [vmem:[#allocation2 + $0x18] sm:$0xff] 0.0
    %185 = vst [vmem:[#allocation2 + $0x20] sm:$0x3] 0.0
    %186 = vst [vmem:[#allocation2 + $0x28] sm:$0xff] 0.0
    %187 = vst [vmem:[#allocation2 + $0x30] sm:$0xff] 0.0
    %188 = vst [vmem:[#allocation2 + $0x38] sm:$0xff] 0.0
    %189 = vst [vmem:[#allocation2 + $0x40] sm:$0xff] 0.0
    %190 = vst [vmem:[#allocation2 + $0x48] sm:$0x3] 0.0
    %v191 = vld [vmem:[#allocation3] sm:$0xff]
    %v192 = vld [vmem:[#allocation3 + $0x8] sm:$0xff]
    %v193 = vld [vmem:[#allocation3 + $0x10] sm:$0xff]
    %v194 = vld [vmem:[#allocation3 + $0x18] sm:$0xff]
    %v195 = vld [vmem:[#allocation3 + $0x20] sm:$0xff]
    %v196 = vld [vmem:[#allocation3 + $0x28] sm:$0xff]
    %v197 = vld [vmem:[#allocation3 + $0x30] sm:$0xff]
    %v198 = vld [vmem:[#allocation3 + $0x38] sm:$0xff]
    %199 = vst [vmem:[#allocation2 + $0x1] sm:$0xff] %v191
    %200 = vst [vmem:[#allocation2 + $0x9] sm:$0xff] %v192
    %201 = vst [vmem:[#allocation2 + $0x11] sm:$0xff] %v193
    %202 = vst [vmem:[#allocation2 + $0x19] sm:$0xff] %v194
    %203 = vst [vmem:[#allocation2 + $0x29] sm:$0xff] %v195
    %204 = vst [vmem:[#allocation2 + $0x31] sm:$0xff] %v196
    %205 = vst [vmem:[#allocation2 + $0x39] sm:$0xff] %v197
    %206 = vst [vmem:[#allocation2 + $0x41] sm:$0xff] %v198
    %v207 = vld [vmem:[#allocation2] sm:$0xff]
    %v208 = vld [vmem:[#allocation2 + $0x8] sm:$0xff]
    %v209 = vld [vmem:[#allocation2 + $0x10] sm:$0xff]
    %v210 = vld [vmem:[#allocation2 + $0x18] sm:$0xff]
    %v211 = vld [vmem:[#allocation2 + $0x28] sm:$0xff]
    %v212 = vld [vmem:[#allocation2 + $0x30] sm:$0xff]
    %v213 = vld [vmem:[#allocation2 + $0x38] sm:$0xff]
    %v214 = vld [vmem:[#allocation2 + $0x40] sm:$0xff]
    %v215 = vld [vmem:[#allocation6] sm:$0xff]
    %v216 = vld [vmem:[#allocation6 + $0x8] sm:$0xff]
    %v217 = vld [vmem:[#allocation6 + $0x10] sm:$0xff]
    %v218 = vld [vmem:[#allocation6 + $0x18] sm:$0xff]
    %v219 = vld [vmem:[#allocation6 + $0x20] sm:$0xff]
    %v220 = vld [vmem:[#allocation6 + $0x28] sm:$0xff]
    %v221 = vld [vmem:[#allocation6 + $0x30] sm:$0xff]
    %v222 = vld [vmem:[#allocation6 + $0x38] sm:$0xff]
    %v223 = vld [vmem:[#allocation6 + $0x40] sm:$0xff]
    %v224 = vld [vmem:[#allocation6 + $0x48] sm:$0xff]
    %v225 = vld [vmem:[#allocation6 + $0x50] sm:$0xff]
    %v226 = vld [vmem:[#allocation6 + $0x58] sm:$0xff]
    %v227 = vld [vmem:[#allocation6 + $0x60] sm:$0xff]
    %v228 = vld [vmem:[#allocation6 + $0x68] sm:$0xff]
    %v229 = vld [vmem:[#allocation6 + $0x70] sm:$0xff]
    %v230 = vld [vmem:[#allocation6 + $0x78] sm:$0xff]
    %v231 = vld [vmem:[#allocation2 + $0x1] sm:$0xff]
    %v232 = vld [vmem:[#allocation2 + $0x9] sm:$0xff]
    %v233 = vld [vmem:[#allocation2 + $0x11] sm:$0xff]
    %v234 = vld [vmem:[#allocation2 + $0x19] sm:$0xff]
    %v235 = vld [vmem:[#allocation2 + $0x29] sm:$0xff]
    %v236 = vld [vmem:[#allocation2 + $0x31] sm:$0xff]
    %v237 = vld [vmem:[#allocation2 + $0x39] sm:$0xff]
    %v238 = vld [vmem:[#allocation2 + $0x41] sm:$0xff]
    %s239 = scalar_lea.vmem [#allocation6], 128
    %v240 = vld [vmem:[%s239] sm:$0xff]
    %v241 = vld [vmem:[%s239 + $0x8] sm:$0xff]
    %v242 = vld [vmem:[%s239 + $0x10] sm:$0xff]
    %v243 = vld [vmem:[%s239 + $0x18] sm:$0xff]
    %v244 = vld [vmem:[%s239 + $0x20] sm:$0xff]
    %v245 = vld [vmem:[%s239 + $0x28] sm:$0xff]
    %v246 = vld [vmem:[%s239 + $0x30] sm:$0xff]
    %v247 = vld [vmem:[%s239 + $0x38] sm:$0xff]
    %v248 = vld [vmem:[%s239 + $0x40] sm:$0xff]
    %v249 = vld [vmem:[%s239 + $0x48] sm:$0xff]
    %v250 = vld [vmem:[%s239 + $0x50] sm:$0xff]
    %v251 = vld [vmem:[%s239 + $0x58] sm:$0xff]
    %v252 = vld [vmem:[%s239 + $0x60] sm:$0xff]
    %v253 = vld [vmem:[%s239 + $0x68] sm:$0xff]
    %v254 = vld [vmem:[%s239 + $0x70] sm:$0xff]
    %v255 = vld [vmem:[%s239 + $0x78] sm:$0xff]
    %256 = vmatpush.msra.mxu0 %v255
    %257 = vmatpush.msra.mxu0 %v254
    %258 = vmatpush.msra.mxu0 %v253
    %259 = vmatpush.msra.mxu0 %v252
    %260 = vmatpush.msra.mxu0 %v251
    %261 = vmatpush.msra.mxu0 %v250
    %262 = vmatpush.msra.mxu0 %v249
    %263 = vmatpush.msra.mxu0 %v248
    %264 = vmatpush.msra.mxu0 %v247
    %265 = vmatpush.msra.mxu0 %v246
    %266 = vmatpush.msra.mxu0 %v245
    %267 = vmatpush.msra.mxu0 %v244
    %268 = vmatpush.msra.mxu0 %v243
    %269 = vmatpush.msra.mxu0 %v242
    %270 = vmatpush.msra.mxu0 %v241
    %271 = vmatpush.msra.mxu0 %v240
    %272 = vmatmul.f32.gmra.mxu0 %v231
    %v273 = vpop.f32.mrf.mxu0
    %v274 = vadd.f32 0.0, %v273
    %275 = vmatmul.f32.gmra.mxu0 %v232
    %v276 = vpop.f32.mrf.mxu0
    %v277 = vadd.f32 0.0, %v276
    %278 = vmatmul.f32.gmra.mxu0 %v233
    %v279 = vpop.f32.mrf.mxu0
    %v280 = vadd.f32 0.0, %v279
    %281 = vmatmul.f32.gmra.mxu0 %v234
    %v282 = vpop.f32.mrf.mxu0
    %v283 = vadd.f32 0.0, %v282
    %284 = vmatmul.f32.gmra.mxu0 %v235
    %v285 = vpop.f32.mrf.mxu0
    %v286 = vadd.f32 0.0, %v285
    %287 = vmatmul.f32.gmra.mxu0 %v236
    %v288 = vpop.f32.mrf.mxu0
    %v289 = vadd.f32 0.0, %v288
    %290 = vmatmul.f32.gmra.mxu0 %v237
    %v291 = vpop.f32.mrf.mxu0
    %v292 = vadd.f32 0.0, %v291
    %293 = vmatmul.f32.gmra.mxu0 %v238
    %v294 = vpop.f32.mrf.mxu0
    %v295 = vadd.f32 0.0, %v294
    %296 = vdwg.mxu0
    %297 = vmatpush.msra.mxu0 %v230
    %298 = vmatpush.msra.mxu0 %v229
    %299 = vmatpush.msra.mxu0 %v228
    %300 = vmatpush.msra.mxu0 %v227
    %301 = vmatpush.msra.mxu0 %v226
    %302 = vmatpush.msra.mxu0 %v225
    %303 = vmatpush.msra.mxu0 %v224
    %304 = vmatpush.msra.mxu0 %v223
    %305 = vmatpush.msra.mxu0 %v222
    %306 = vmatpush.msra.mxu0 %v221
    %307 = vmatpush.msra.mxu0 %v220
    %308 = vmatpush.msra.mxu0 %v219
    %309 = vmatpush.msra.mxu0 %v218
    %310 = vmatpush.msra.mxu0 %v217
    %311 = vmatpush.msra.mxu0 %v216
    %312 = vmatpush.msra.mxu0 %v215
    %313 = vmatmul.f32.gmra.mxu0 %v207
    %v314 = vpop.f32.mrf.mxu0
    %v315 = vadd.f32 %v274, %v314
    %316 = vmatmul.f32.gmra.mxu0 %v208
    %v317 = vpop.f32.mrf.mxu0
    %v318 = vadd.f32 %v277, %v317
    %319 = vmatmul.f32.gmra.mxu0 %v209
    %v320 = vpop.f32.mrf.mxu0
    %v321 = vadd.f32 %v280, %v320
    %322 = vmatmul.f32.gmra.mxu0 %v210
    %v323 = vpop.f32.mrf.mxu0
    %v324 = vadd.f32 %v283, %v323
    %325 = vmatmul.f32.gmra.mxu0 %v211
    %v326 = vpop.f32.mrf.mxu0
    %v327 = vadd.f32 %v286, %v326
    %328 = vmatmul.f32.gmra.mxu0 %v212
    %v329 = vpop.f32.mrf.mxu0
    %v330 = vadd.f32 %v289, %v329
    %331 = vmatmul.f32.gmra.mxu0 %v213
    %v332 = vpop.f32.mrf.mxu0
    %v333 = vadd.f32 %v292, %v332
    %334 = vmatmul.f32.gmra.mxu0 %v214
    %v335 = vpop.f32.mrf.mxu0
    %v336 = vadd.f32 %v295, %v335
    %337 = vdwg.mxu0
    %v338 = vld [vmem:[#allocation2 + $0x2] sm:$0xff]
    %v339 = vld [vmem:[#allocation2 + $0xa] sm:$0xff]
    %v340 = vld [vmem:[#allocation2 + $0x12] sm:$0xff]
    %v341 = vld [vmem:[#allocation2 + $0x1a] sm:$0xff]
    %v342 = vld [vmem:[#allocation2 + $0x2a] sm:$0xff]
    %v343 = vld [vmem:[#allocation2 + $0x32] sm:$0xff]
    %v344 = vld [vmem:[#allocation2 + $0x3a] sm:$0xff]
    %v345 = vld [vmem:[#allocation2 + $0x42] sm:$0xff]
    %s346 = scalar_lea.vmem [#allocation6], 256
    %v347 = vld [vmem:[%s346] sm:$0xff]
    %v348 = vld [vmem:[%s346 + $0x8] sm:$0xff]
    %v349 = vld [vmem:[%s346 + $0x10] sm:$0xff]
    %v350 = vld [vmem:[%s346 + $0x18] sm:$0xff]
    %v351 = vld [vmem:[%s346 + $0x20] sm:$0xff]
    %v352 = vld [vmem:[%s346 + $0x28] sm:$0xff]
    %v353 = vld [vmem:[%s346 + $0x30] sm:$0xff]
    %v354 = vld [vmem:[%s346 + $0x38] sm:$0xff]
    %v355 = vld [vmem:[%s346 + $0x40] sm:$0xff]
    %v356 = vld [vmem:[%s346 + $0x48] sm:$0xff]
    %v357 = vld [vmem:[%s346 + $0x50] sm:$0xff]
    %v358 = vld [vmem:[%s346 + $0x58] sm:$0xff]
    %v359 = vld [vmem:[%s346 + $0x60] sm:$0xff]
    %v360 = vld [vmem:[%s346 + $0x68] sm:$0xff]
    %v361 = vld [vmem:[%s346 + $0x70] sm:$0xff]
    %v362 = vld [vmem:[%s346 + $0x78] sm:$0xff]
    %363 = vmatpush.msra.mxu0 %v362
    %364 = vmatpush.msra.mxu0 %v361
    %365 = vmatpush.msra.mxu0 %v360
    %366 = vmatpush.msra.mxu0 %v359
    %367 = vmatpush.msra.mxu0 %v358
    %368 = vmatpush.msra.mxu0 %v357
    %369 = vmatpush.msra.mxu0 %v356
    %370 = vmatpush.msra.mxu0 %v355
    %371 = vmatpush.msra.mxu0 %v354
    %372 = vmatpush.msra.mxu0 %v353
    %373 = vmatpush.msra.mxu0 %v352
    %374 = vmatpush.msra.mxu0 %v351
    %375 = vmatpush.msra.mxu0 %v350
    %376 = vmatpush.msra.mxu0 %v349
    %377 = vmatpush.msra.mxu0 %v348
    %378 = vmatpush.msra.mxu0 %v347
    %379 = vmatmul.f32.gmra.mxu0 %v338
    %v380 = vpop.f32.mrf.mxu0
    %v381 = vadd.f32 0.0, %v380
    %382 = vmatmul.f32.gmra.mxu0 %v339
    %v383 = vpop.f32.mrf.mxu0
    %v384 = vadd.f32 0.0, %v383
    %385 = vmatmul.f32.gmra.mxu0 %v340
    %v386 = vpop.f32.mrf.mxu0
    %v387 = vadd.f32 0.0, %v386
    %388 = vmatmul.f32.gmra.mxu0 %v341
    %v389 = vpop.f32.mrf.mxu0
    %v390 = vadd.f32 0.0, %v389
    %391 = vmatmul.f32.gmra.mxu0 %v342
    %v392 = vpop.f32.mrf.mxu0
    %v393 = vadd.f32 0.0, %v392
    %394 = vmatmul.f32.gmra.mxu0 %v343
    %v395 = vpop.f32.mrf.mxu0
    %v396 = vadd.f32 0.0, %v395
    %397 = vmatmul.f32.gmra.mxu0 %v344
    %v398 = vpop.f32.mrf.mxu0
    %v399 = vadd.f32 0.0, %v398
    %400 = vmatmul.f32.gmra.mxu0 %v345
    %v401 = vpop.f32.mrf.mxu0
    %v402 = vadd.f32 0.0, %v401
    %403 = vdwg.mxu0
    %v404 = vadd.f32 %v315, %v381
    %v405 = vadd.f32 %v318, %v384
    %v406 = vadd.f32 %v321, %v387
    %v407 = vadd.f32 %v324, %v390
    %v408 = vadd.f32 %v327, %v393
    %v409 = vadd.f32 %v330, %v396
    %v410 = vadd.f32 %v333, %v399
    %v411 = vadd.f32 %v336, %v402
    %v412 = vadd.f32 %v404, %v405
    %v413 = vadd.f32 %v412, %v406
    %v414 = vadd.f32 %v413, %v407
    %v415 = vadd.f32 %v414, %v408
    %v416 = vadd.f32 %v415, %v409
    %v417 = vadd.f32 %v416, %v410
    %v418 = vadd.f32 %v417, %v411
    %v419 = vrot.slane %v418, 4
    %v420 = vadd.f32 %v418, %v419
    %v421 = vrot.slane %v420, 2
    %v422 = vadd.f32 %v420, %v421
    %v423 = vrot.slane %v422, 1
    %v424 = vadd.f32 %v422, %v423
    %v425 = vmul.f32 %v404, %v404
    %v426 = vmul.f32 %v405, %v405
    %v427 = vmul.f32 %v406, %v406
    %v428 = vmul.f32 %v407, %v407
    %v429 = vmul.f32 %v408, %v408
    %v430 = vmul.f32 %v409, %v409
    %v431 = vmul.f32 %v410, %v410
    %v432 = vmul.f32 %v411, %v411
    %v433 = vadd.f32 %v425, %v426
    %v434 = vadd.f32 %v433, %v427
    %v435 = vadd.f32 %v434, %v428
    %v436 = vadd.f32 %v435, %v429
    %v437 = vadd.f32 %v436, %v430
    %v438 = vadd.f32 %v437, %v431
    %v439 = vadd.f32 %v438, %v432
    %v440 = vrot.slane %v439, 4
    %v441 = vadd.f32 %v439, %v440
    %v442 = vrot.slane %v441, 2
    %v443 = vadd.f32 %v441, %v442
    %v444 = vrot.slane %v443, 1
    %v445 = vadd.f32 %v443, %v444
    %v446 = vld [vmem:[#allocation8] sm:$0xff]
    %v447 = vld [vmem:[#allocation8 + $0x8] sm:$0xff]
    %v448 = vld [vmem:[#allocation8 + $0x10] sm:$0xff]
    %v449 = vld [vmem:[#allocation8 + $0x18] sm:$0xff]
    %v450 = vld [vmem:[#allocation8 + $0x20] sm:$0xff]
    %v451 = vld [vmem:[#allocation8 + $0x28] sm:$0xff]
    %v452 = vld [vmem:[#allocation8 + $0x30] sm:$0xff]
    %v453 = vld [vmem:[#allocation8 + $0x38] sm:$0xff]
    %v454 = vld [vmem:[#allocation8 + $0x40] sm:$0xff]
    %v455 = vld [vmem:[#allocation8 + $0x48] sm:$0xff]
    %v456 = vld [vmem:[#allocation8 + $0x50] sm:$0xff]
    %v457 = vld [vmem:[#allocation8 + $0x58] sm:$0xff]
    %v458 = vld [vmem:[#allocation8 + $0x60] sm:$0xff]
    %v459 = vld [vmem:[#allocation8 + $0x68] sm:$0xff]
    %v460 = vld [vmem:[#allocation8 + $0x70] sm:$0xff]
    %v461 = vld [vmem:[#allocation8 + $0x78] sm:$0xff]
    %462 = vmatpush.msra.mxu0 %v461
    %463 = vmatpush.msra.mxu0 %v460
    %464 = vmatpush.msra.mxu0 %v459
    %465 = vmatpush.msra.mxu0 %v458
    %466 = vmatpush.msra.mxu0 %v457
    %467 = vmatpush.msra.mxu0 %v456
    %468 = vmatpush.msra.mxu0 %v455
    %469 = vmatpush.msra.mxu0 %v454
    %470 = vmatpush.msra.mxu0 %v453
    %471 = vmatpush.msra.mxu0 %v452
    %472 = vmatpush.msra.mxu0 %v451
    %473 = vmatpush.msra.mxu0 %v450
    %474 = vmatpush.msra.mxu0 %v449
    %475 = vmatpush.msra.mxu0 %v448
    %476 = vmatpush.msra.mxu0 %v447
    %477 = vmatpush.msra.mxu0 %v446
    %478 = vmatmul.f32.gmra.mxu0 %v424
    %v479 = vpop.f32.mrf.mxu0
    %v480 = vadd.f32 0.0, %v479
    %481 = vdwg.mxu0
    %482 = vmatpush.msra.mxu0 %v461
    %483 = vmatpush.msra.mxu0 %v460
    %484 = vmatpush.msra.mxu0 %v459
    %485 = vmatpush.msra.mxu0 %v458
    %486 = vmatpush.msra.mxu0 %v457
    %487 = vmatpush.msra.mxu0 %v456
    %488 = vmatpush.msra.mxu0 %v455
    %489 = vmatpush.msra.mxu0 %v454
    %490 = vmatpush.msra.mxu0 %v453
    %491 = vmatpush.msra.mxu0 %v452
    %492 = vmatpush.msra.mxu0 %v451
    %493 = vmatpush.msra.mxu0 %v450
    %494 = vmatpush.msra.mxu0 %v449
    %495 = vmatpush.msra.mxu0 %v448
    %496 = vmatpush.msra.mxu0 %v447
    %497 = vmatpush.msra.mxu0 %v446
    %498 = vmatmul.f32.gmra.mxu0 %v445
    %v499 = vpop.f32.mrf.mxu0
    %v500 = vadd.f32 0.0, %v499
    %501 = vdwg.mxu0
    %v502 = vmul.f32 %v480, %v480
    %v503 = vsub.f32 %v500, %v502
    %v504 = vmax.f32 %v503, 0.0
    %v505 = vld [vmem:[#allocation9] sm:$0x1]
    %v506 = vadd.f32 %v504, 1e-05
    %v507 = vrsqrt.pop %v506
    %v508 = vmul.f32 %v507, %v506
    %v509 = vmul.f32 %v508, %v507
    %v510 = vmul.f32 0.5, %v509
    %v511 = vsub.f32 1.5, %v510
    %v512 = vmul.f32 %v507, %v511
    %vm513 = vweird.f32 %v506
    %vm514 = vweird.f32 %v507
    %vm515 = vmor %vm513, %vm514
    %v516 = vsel %vm515, %v507, %v512
    %v517 = vmul.f32 %v505, %v516
    %v518 = vld [vmem:[#allocation11] sm:$0x1]
    %v519 = vmul.f32 %v480, %v517
    %v520 = vsub.f32 %v518, %v519
    %v522 = vperm.slane %v517, 0
    %v524 = vmul.f32 %v404, %v522
    %v525 = vmul.f32 %v405, %v522
    %v526 = vmul.f32 %v406, %v522
    %v527 = vmul.f32 %v407, %v522
    %v528 = vmul.f32 %v408, %v522
    %v529 = vmul.f32 %v409, %v522
    %v530 = vmul.f32 %v410, %v522
    %v531 = vmul.f32 %v411, %v522
    %v533 = vperm.slane %v520, 0
    %v535 = vadd.f32 %v524, %v533
    %v536 = vadd.f32 %v525, %v533
    %v537 = vadd.f32 %v526, %v533
    %v538 = vadd.f32 %v527, %v533
    %v539 = vadd.f32 %v528, %v533
    %v540 = vadd.f32 %v529, %v533
    %v541 = vadd.f32 %v530, %v533
    %v542 = vadd.f32 %v531, %v533
    %v543 = vmax.f32 %v535, 0.0
    %v544 = vmax.f32 %v536, 0.0
    %v545 = vmax.f32 %v537, 0.0
    %v546 = vmax.f32 %v538, 0.0
    %v547 = vmax.f32 %v539, 0.0
    %v548 = vmax.f32 %v540, 0.0
    %v549 = vmax.f32 %v541, 0.0
    %v550 = vmax.f32 %v542, 0.0
    %551 = vst [vmem:[#allocation2 + $0x1] sm:$0xff] %v543
    %552 = vst [vmem:[#allocation2 + $0x9] sm:$0xff] %v544
    %553 = vst [vmem:[#allocation2 + $0x11] sm:$0xff] %v545
    %554 = vst [vmem:[#allocation2 + $0x19] sm:$0xff] %v546
    %555 = vst [vmem:[#allocation2 + $0x29] sm:$0xff] %v547
    %556 = vst [vmem:[#allocation2 + $0x31] sm:$0xff] %v548
    %557 = vst [vmem:[#allocation2 + $0x39] sm:$0xff] %v549
    %558 = vst [vmem:[#allocation2 + $0x41] sm:$0xff] %v550
    %v559 = vld [vmem:[#allocation2] sm:$0xff]
    %v560 = vld [vmem:[#allocation2 + $0x8] sm:$0xff]
    %v561 = vld [vmem:[#allocation2 + $0x10] sm:$0xff]
    %v562 = vld [vmem:[#allocation2 + $0x18] sm:$0xff]
    %v563 = vld [vmem:[#allocation2 + $0x28] sm:$0xff]
    %v564 = vld [vmem:[#allocation2 + $0x30] sm:$0xff]
    %v565 = vld [vmem:[#allocation2 + $0x38] sm:$0xff]
    %v566 = vld [vmem:[#allocation2 + $0x40] sm:$0xff]
    %v567 = vld [vmem:[#allocation12] sm:$0xff]
    %v568 = vld [vmem:[#allocation12 + $0x8] sm:$0xff]
    %v569 = vld [vmem:[#allocation12 + $0x10] sm:$0xff]
    %v570 = vld [vmem:[#allocation12 + $0x18] sm:$0xff]
    %v571 = vld [vmem:[#allocation12 + $0x20] sm:$0xff]
    %v572 = vld [vmem:[#allocation12 + $0x28] sm:$0xff]
    %v573 = vld [vmem:[#allocation12 + $0x30] sm:$0xff]
    %v574 = vld [vmem:[#allocation12 + $0x38] sm:$0xff]
    %v575 = vld [vmem:[#allocation12 + $0x40] sm:$0xff]
    %v576 = vld [vmem:[#allocation12 + $0x48] sm:$0xff]
    %v577 = vld [vmem:[#allocation12 + $0x50] sm:$0xff]
    %v578 = vld [vmem:[#allocation12 + $0x58] sm:$0xff]
    %v579 = vld [vmem:[#allocation12 + $0x60] sm:$0xff]
    %v580 = vld [vmem:[#allocation12 + $0x68] sm:$0xff]
    %v581 = vld [vmem:[#allocation12 + $0x70] sm:$0xff]
    %v582 = vld [vmem:[#allocation12 + $0x78] sm:$0xff]
    %v583 = vld [vmem:[#allocation2 + $0x1] sm:$0xff]
    %v584 = vld [vmem:[#allocation2 + $0x9] sm:$0xff]
    %v585 = vld [vmem:[#allocation2 + $0x11] sm:$0xff]
    %v586 = vld [vmem:[#allocation2 + $0x19] sm:$0xff]
    %v587 = vld [vmem:[#allocation2 + $0x29] sm:$0xff]
    %v588 = vld [vmem:[#allocation2 + $0x31] sm:$0xff]
    %v589 = vld [vmem:[#allocation2 + $0x39] sm:$0xff]
    %v590 = vld [vmem:[#allocation2 + $0x41] sm:$0xff]
    %s591 = scalar_lea.vmem [#allocation12], 128
    %v592 = vld [vmem:[%s591] sm:$0xff]
    %v593 = vld [vmem:[%s591 + $0x8] sm:$0xff]
    %v594 = vld [vmem:[%s591 + $0x10] sm:$0xff]
    %v595 = vld [vmem:[%s591 + $0x18] sm:$0xff]
    %v596 = vld [vmem:[%s591 + $0x20] sm:$0xff]
    %v597 = vld [vmem:[%s591 + $0x28] sm:$0xff]
    %v598 = vld [vmem:[%s591 + $0x30] sm:$0xff]
    %v599 = vld [vmem:[%s591 + $0x38] sm:$0xff]
    %v600 = vld [vmem:[%s591 + $0x40] sm:$0xff]
    %v601 = vld [vmem:[%s591 + $0x48] sm:$0xff]
    %v602 = vld [vmem:[%s591 + $0x50] sm:$0xff]
    %v603 = vld [vmem:[%s591 + $0x58] sm:$0xff]
    %v604 = vld [vmem:[%s591 + $0x60] sm:$0xff]
    %v605 = vld [vmem:[%s591 + $0x68] sm:$0xff]
    %v606 = vld [vmem:[%s591 + $0x70] sm:$0xff]
    %v607 = vld [vmem:[%s591 + $0x78] sm:$0xff]
    %608 = vmatpush.msra.mxu0 %v607
    %609 = vmatpush.msra.mxu0 %v606
    %610 = vmatpush.msra.mxu0 %v605
    %611 = vmatpush.msra.mxu0 %v604
    %612 = vmatpush.msra.mxu0 %v603
    %613 = vmatpush.msra.mxu0 %v602
    %614 = vmatpush.msra.mxu0 %v601
    %615 = vmatpush.msra.mxu0 %v600
    %616 = vmatpush.msra.mxu0 %v599
    %617 = vmatpush.msra.mxu0 %v598
    %618 = vmatpush.msra.mxu0 %v597
    %619 = vmatpush.msra.mxu0 %v596
    %620 = vmatpush.msra.mxu0 %v595
    %621 = vmatpush.msra.mxu0 %v594
    %622 = vmatpush.msra.mxu0 %v593
    %623 = vmatpush.msra.mxu0 %v592
    %624 = vmatmul.f32.gmra.mxu0 %v583
    %v625 = vpop.f32.mrf.mxu0
    %v626 = vadd.f32 0.0, %v625
    %627 = vmatmul.f32.gmra.mxu0 %v584
    %v628 = vpop.f32.mrf.mxu0
    %v629 = vadd.f32 0.0, %v628
    %630 = vmatmul.f32.gmra.mxu0 %v585
    %v631 = vpop.f32.mrf.mxu0
    %v632 = vadd.f32 0.0, %v631
    %633 = vmatmul.f32.gmra.mxu0 %v586
    %v634 = vpop.f32.mrf.mxu0
    %v635 = vadd.f32 0.0, %v634
    %636 = vmatmul.f32.gmra.mxu0 %v587
    %v637 = vpop.f32.mrf.mxu0
    %v638 = vadd.f32 0.0, %v637
    %639 = vmatmul.f32.gmra.mxu0 %v588
    %v640 = vpop.f32.mrf.mxu0
    %v641 = vadd.f32 0.0, %v640
    %642 = vmatmul.f32.gmra.mxu0 %v589
    %v643 = vpop.f32.mrf.mxu0
    %v644 = vadd.f32 0.0, %v643
    %645 = vmatmul.f32.gmra.mxu0 %v590
    %v646 = vpop.f32.mrf.mxu0
    %v647 = vadd.f32 0.0, %v646
    %648 = vdwg.mxu0
    %649 = vmatpush.msra.mxu0 %v582
    %650 = vmatpush.msra.mxu0 %v581
    %651 = vmatpush.msra.mxu0 %v580
    %652 = vmatpush.msra.mxu0 %v579
    %653 = vmatpush.msra.mxu0 %v578
    %654 = vmatpush.msra.mxu0 %v577
    %655 = vmatpush.msra.mxu0 %v576
    %656 = vmatpush.msra.mxu0 %v575
    %657 = vmatpush.msra.mxu0 %v574
    %658 = vmatpush.msra.mxu0 %v573
    %659 = vmatpush.msra.mxu0 %v572
    %660 = vmatpush.msra.mxu0 %v571
    %661 = vmatpush.msra.mxu0 %v570
    %662 = vmatpush.msra.mxu0 %v569
    %663 = vmatpush.msra.mxu0 %v568
    %664 = vmatpush.msra.mxu0 %v567
    %665 = vmatmul.f32.gmra.mxu0 %v559
    %v666 = vpop.f32.mrf.mxu0
    %v667 = vadd.f32 %v626, %v666
    %668 = vmatmul.f32.gmra.mxu0 %v560
    %v669 = vpop.f32.mrf.mxu0
    %v670 = vadd.f32 %v629, %v669
    %671 = vmatmul.f32.gmra.mxu0 %v561
    %v672 = vpop.f32.mrf.mxu0
    %v673 = vadd.f32 %v632, %v672
    %674 = vmatmul.f32.gmra.mxu0 %v562
    %v675 = vpop.f32.mrf.mxu0
    %v676 = vadd.f32 %v635, %v675
    %677 = vmatmul.f32.gmra.mxu0 %v563
    %v678 = vpop.f32.mrf.mxu0
    %v679 = vadd.f32 %v638, %v678
    %680 = vmatmul.f32.gmra.mxu0 %v564
    %v681 = vpop.f32.mrf.mxu0
    %v682 = vadd.f32 %v641, %v681
    %683 = vmatmul.f32.gmra.mxu0 %v565
    %v684 = vpop.f32.mrf.mxu0
    %v685 = vadd.f32 %v644, %v684
    %686 = vmatmul.f32.gmra.mxu0 %v566
    %v687 = vpop.f32.mrf.mxu0
    %v688 = vadd.f32 %v647, %v687
    %689 = vdwg.mxu0
    %v690 = vld [vmem:[#allocation2 + $0x2] sm:$0xff]
    %v691 = vld [vmem:[#allocation2 + $0xa] sm:$0xff]
    %v692 = vld [vmem:[#allocation2 + $0x12] sm:$0xff]
    %v693 = vld [vmem:[#allocation2 + $0x1a] sm:$0xff]
    %v694 = vld [vmem:[#allocation2 + $0x2a] sm:$0xff]
    %v695 = vld [vmem:[#allocation2 + $0x32] sm:$0xff]
    %v696 = vld [vmem:[#allocation2 + $0x3a] sm:$0xff]
    %v697 = vld [vmem:[#allocation2 + $0x42] sm:$0xff]
    %s698 = scalar_lea.vmem [#allocation12], 256
    %v699 = vld [vmem:[%s698] sm:$0xff]
    %v700 = vld [vmem:[%s698 + $0x8] sm:$0xff]
    %v701 = vld [vmem:[%s698 + $0x10] sm:$0xff]
    %v702 = vld [vmem:[%s698 + $0x18] sm:$0xff]
    %v703 = vld [vmem:[%s698 + $0x20] sm:$0xff]
    %v704 = vld [vmem:[%s698 + $0x28] sm:$0xff]
    %v705 = vld [vmem:[%s698 + $0x30] sm:$0xff]
    %v706 = vld [vmem:[%s698 + $0x38] sm:$0xff]
    %v707 = vld [vmem:[%s698 + $0x40] sm:$0xff]
    %v708 = vld [vmem:[%s698 + $0x48] sm:$0xff]
    %v709 = vld [vmem:[%s698 + $0x50] sm:$0xff]
    %v710 = vld [vmem:[%s698 + $0x58] sm:$0xff]
    %v711 = vld [vmem:[%s698 + $0x60] sm:$0xff]
    %v712 = vld [vmem:[%s698 + $0x68] sm:$0xff]
    %v713 = vld [vmem:[%s698 + $0x70] sm:$0xff]
    %v714 = vld [vmem:[%s698 + $0x78] sm:$0xff]
    %715 = vmatpush.msra.mxu0 %v714
    %716 = vmatpush.msra.mxu0 %v713
    %717 = vmatpush.msra.mxu0 %v712
    %718 = vmatpush.msra.mxu0 %v711
    %719 = vmatpush.msra.mxu0 %v710
    %720 = vmatpush.msra.mxu0 %v709
    %721 = vmatpush.msra.mxu0 %v708
    %722 = vmatpush.msra.mxu0 %v707
    %723 = vmatpush.msra.mxu0 %v706
    %724 = vmatpush.msra.mxu0 %v705
    %725 = vmatpush.msra.mxu0 %v704
    %726 = vmatpush.msra.mxu0 %v703
    %727 = vmatpush.msra.mxu0 %v702
    %728 = vmatpush.msra.mxu0 %v701
    %729 = vmatpush.msra.mxu0 %v700
    %730 = vmatpush.msra.mxu0 %v699
    %731 = vmatmul.f32.gmra.mxu0 %v690
    %v732 = vpop.f32.mrf.mxu0
    %v733 = vadd.f32 0.0, %v732
    %734 = vmatmul.f32.gmra.mxu0 %v691
    %v735 = vpop.f32.mrf.mxu0
    %v736 = vadd.f32 0.0, %v735
    %737 = vmatmul.f32.gmra.mxu0 %v692
    %v738 = vpop.f32.mrf.mxu0
    %v739 = vadd.f32 0.0, %v738
    %740 = vmatmul.f32.gmra.mxu0 %v693
    %v741 = vpop.f32.mrf.mxu0
    %v742 = vadd.f32 0.0, %v741
    %743 = vmatmul.f32.gmra.mxu0 %v694
    %v744 = vpop.f32.mrf.mxu0
    %v745 = vadd.f32 0.0, %v744
    %746 = vmatmul.f32.gmra.mxu0 %v695
    %v747 = vpop.f32.mrf.mxu0
    %v748 = vadd.f32 0.0, %v747
    %749 = vmatmul.f32.gmra.mxu0 %v696
    %v750 = vpop.f32.mrf.mxu0
    %v751 = vadd.f32 0.0, %v750
    %752 = vmatmul.f32.gmra.mxu0 %v697
    %v753 = vpop.f32.mrf.mxu0
    %v754 = vadd.f32 0.0, %v753
    %755 = vdwg.mxu0
    %v756 = vadd.f32 %v667, %v733
    %v757 = vadd.f32 %v670, %v736
    %v758 = vadd.f32 %v673, %v739
    %v759 = vadd.f32 %v676, %v742
    %v760 = vadd.f32 %v679, %v745
    %v761 = vadd.f32 %v682, %v748
    %v762 = vadd.f32 %v685, %v751
    %v763 = vadd.f32 %v688, %v754
    %v764 = vadd.f32 %v756, %v757
    %v765 = vadd.f32 %v764, %v758
    %v766 = vadd.f32 %v765, %v759
    %v767 = vadd.f32 %v766, %v760
    %v768 = vadd.f32 %v767, %v761
    %v769 = vadd.f32 %v768, %v762
    %v770 = vadd.f32 %v769, %v763
    %v771 = vrot.slane %v770, 4
    %v772 = vadd.f32 %v770, %v771
    %v773 = vrot.slane %v772, 2
    %v774 = vadd.f32 %v772, %v773
    %v775 = vrot.slane %v774, 1
    %v776 = vadd.f32 %v774, %v775
    %v777 = vmul.f32 %v756, %v756
    %v778 = vmul.f32 %v757, %v757
    %v779 = vmul.f32 %v758, %v758
    %v780 = vmul.f32 %v759, %v759
    %v781 = vmul.f32 %v760, %v760
    %v782 = vmul.f32 %v761, %v761
    %v783 = vmul.f32 %v762, %v762
    %v784 = vmul.f32 %v763, %v763
    %v785 = vadd.f32 %v777, %v778
    %v786 = vadd.f32 %v785, %v779
    %v787 = vadd.f32 %v786, %v780
    %v788 = vadd.f32 %v787, %v781
    %v789 = vadd.f32 %v788, %v782
    %v790 = vadd.f32 %v789, %v783
    %v791 = vadd.f32 %v790, %v784
    %v792 = vrot.slane %v791, 4
    %v793 = vadd.f32 %v791, %v792
    %v794 = vrot.slane %v793, 2
    %v795 = vadd.f32 %v793, %v794
    %v796 = vrot.slane %v795, 1
    %v797 = vadd.f32 %v795, %v796
    %v798 = vld [vmem:[#allocation14] sm:$0xff]
    %v799 = vld [vmem:[#allocation14 + $0x8] sm:$0xff]
    %v800 = vld [vmem:[#allocation14 + $0x10] sm:$0xff]
    %v801 = vld [vmem:[#allocation14 + $0x18] sm:$0xff]
    %v802 = vld [vmem:[#allocation14 + $0x20] sm:$0xff]
    %v803 = vld [vmem:[#allocation14 + $0x28] sm:$0xff]
    %v804 = vld [vmem:[#allocation14 + $0x30] sm:$0xff]
    %v805 = vld [vmem:[#allocation14 + $0x38] sm:$0xff]
    %v806 = vld [vmem:[#allocation14 + $0x40] sm:$0xff]
    %v807 = vld [vmem:[#allocation14 + $0x48] sm:$0xff]
    %v808 = vld [vmem:[#allocation14 + $0x50] sm:$0xff]
    %v809 = vld [vmem:[#allocation14 + $0x58] sm:$0xff]
    %v810 = vld [vmem:[#allocation14 + $0x60] sm:$0xff]
    %v811 = vld [vmem:[#allocation14 + $0x68] sm:$0xff]
    %v812 = vld [vmem:[#allocation14 + $0x70] sm:$0xff]
    %v813 = vld [vmem:[#allocation14 + $0x78] sm:$0xff]
    %814 = vmatpush.msra.mxu0 %v813
    %815 = vmatpush.msra.mxu0 %v812
    %816 = vmatpush.msra.mxu0 %v811
    %817 = vmatpush.msra.mxu0 %v810
    %818 = vmatpush.msra.mxu0 %v809
    %819 = vmatpush.msra.mxu0 %v808
    %820 = vmatpush.msra.mxu0 %v807
    %821 = vmatpush.msra.mxu0 %v806
    %822 = vmatpush.msra.mxu0 %v805
    %823 = vmatpush.msra.mxu0 %v804
    %824 = vmatpush.msra.mxu0 %v803
    %825 = vmatpush.msra.mxu0 %v802
    %826 = vmatpush.msra.mxu0 %v801
    %827 = vmatpush.msra.mxu0 %v800
    %828 = vmatpush.msra.mxu0 %v799
    %829 = vmatpush.msra.mxu0 %v798
    %830 = vmatmul.f32.gmra.mxu0 %v776
    %v831 = vpop.f32.mrf.mxu0
    %v832 = vadd.f32 0.0, %v831
    %833 = vdwg.mxu0
    %834 = vmatpush.msra.mxu0 %v813
    %835 = vmatpush.msra.mxu0 %v812
    %836 = vmatpush.msra.mxu0 %v811
    %837 = vmatpush.msra.mxu0 %v810
    %838 = vmatpush.msra.mxu0 %v809
    %839 = vmatpush.msra.mxu0 %v808
    %840 = vmatpush.msra.mxu0 %v807
    %841 = vmatpush.msra.mxu0 %v806
    %842 = vmatpush.msra.mxu0 %v805
    %843 = vmatpush.msra.mxu0 %v804
    %844 = vmatpush.msra.mxu0 %v803
    %845 = vmatpush.msra.mxu0 %v802
    %846 = vmatpush.msra.mxu0 %v801
    %847 = vmatpush.msra.mxu0 %v800
    %848 = vmatpush.msra.mxu0 %v799
    %849 = vmatpush.msra.mxu0 %v798
    %850 = vmatmul.f32.gmra.mxu0 %v797
    %v851 = vpop.f32.mrf.mxu0
    %v852 = vadd.f32 0.0, %v851
    %853 = vdwg.mxu0
    %v854 = vmul.f32 %v832, %v832
    %v855 = vsub.f32 %v852, %v854
    %v856 = vmax.f32 %v855, 0.0
    %v857 = vld [vmem:[%s7] sm:$0x1]
    %v858 = vadd.f32 %v856, 1e-05
    %v859 = vrsqrt.pop %v858
    %v860 = vmul.f32 %v859, %v858
    %v861 = vmul.f32 %v860, %v859
    %v862 = vmul.f32 0.5, %v861
    %v863 = vsub.f32 1.5, %v862
    %v864 = vmul.f32 %v859, %v863
    %vm865 = vweird.f32 %v858
    %vm866 = vweird.f32 %v859
    %vm867 = vmor %vm865, %vm866
    %v868 = vsel %vm867, %v859, %v864
    %v869 = vmul.f32 %v857, %v868
    %v870 = vld [vmem:[%s8] sm:$0x1]
    %v871 = vmul.f32 %v832, %v869
    %v872 = vsub.f32 %v870, %v871
    %v874 = vperm.slane %v869, 0
    %v876 = vmul.f32 %v756, %v874
    %v877 = vmul.f32 %v757, %v874
    %v878 = vmul.f32 %v758, %v874
    %v879 = vmul.f32 %v759, %v874
    %v880 = vmul.f32 %v760, %v874
    %v881 = vmul.f32 %v761, %v874
    %v882 = vmul.f32 %v762, %v874
    %v883 = vmul.f32 %v763, %v874
    %v885 = vperm.slane %v872, 0
    %v887 = vadd.f32 %v876, %v885
    %v888 = vadd.f32 %v877, %v885
    %v889 = vadd.f32 %v878, %v885
    %v890 = vadd.f32 %v879, %v885
    %v891 = vadd.f32 %v880, %v885
    %v892 = vadd.f32 %v881, %v885
    %v893 = vadd.f32 %v882, %v885
    %v894 = vadd.f32 %v883, %v885
    %v895 = vmax.f32 %v887, 0.0
    %v896 = vmax.f32 %v888, 0.0
    %v897 = vmax.f32 %v889, 0.0
    %v898 = vmax.f32 %v890, 0.0
    %v899 = vmax.f32 %v891, 0.0
    %v900 = vmax.f32 %v892, 0.0
    %v901 = vmax.f32 %v893, 0.0
    %v902 = vmax.f32 %v894, 0.0
    %903 = vst [vmem:[#allocation2 + $0x1] sm:$0xff] %v895
    %904 = vst [vmem:[#allocation2 + $0x9] sm:$0xff] %v896
    %905 = vst [vmem:[#allocation2 + $0x11] sm:$0xff] %v897
    %906 = vst [vmem:[#allocation2 + $0x19] sm:$0xff] %v898
    %907 = vst [vmem:[#allocation2 + $0x29] sm:$0xff] %v899
    %908 = vst [vmem:[#allocation2 + $0x31] sm:$0xff] %v900
    %909 = vst [vmem:[#allocation2 + $0x39] sm:$0xff] %v901
    %910 = vst [vmem:[#allocation2 + $0x41] sm:$0xff] %v902
    %v911 = vld [vmem:[#allocation2] sm:$0xff]
    %v912 = vld [vmem:[#allocation2 + $0x8] sm:$0xff]
    %v913 = vld [vmem:[#allocation2 + $0x10] sm:$0xff]
    %v914 = vld [vmem:[#allocation2 + $0x18] sm:$0xff]
    %v915 = vld [vmem:[#allocation2 + $0x28] sm:$0xff]
    %v916 = vld [vmem:[#allocation2 + $0x30] sm:$0xff]
    %v917 = vld [vmem:[#allocation2 + $0x38] sm:$0xff]
    %v918 = vld [vmem:[#allocation2 + $0x40] sm:$0xff]
    %v919 = vld [vmem:[#allocation15] sm:$0xff]
    %v920 = vld [vmem:[#allocation15 + $0x8] sm:$0xff]
    %v921 = vld [vmem:[#allocation15 + $0x10] sm:$0xff]
    %v922 = vld [vmem:[#allocation15 + $0x18] sm:$0xff]
    %v923 = vld [vmem:[#allocation15 + $0x20] sm:$0xff]
    %v924 = vld [vmem:[#allocation15 + $0x28] sm:$0xff]
    %v925 = vld [vmem:[#allocation15 + $0x30] sm:$0xff]
    %v926 = vld [vmem:[#allocation15 + $0x38] sm:$0xff]
    %v927 = vld [vmem:[#allocation15 + $0x40] sm:$0xff]
    %v928 = vld [vmem:[#allocation15 + $0x48] sm:$0xff]
    %v929 = vld [vmem:[#allocation15 + $0x50] sm:$0xff]
    %v930 = vld [vmem:[#allocation15 + $0x58] sm:$0xff]
    %v931 = vld [vmem:[#allocation15 + $0x60] sm:$0xff]
    %v932 = vld [vmem:[#allocation15 + $0x68] sm:$0xff]
    %v933 = vld [vmem:[#allocation15 + $0x70] sm:$0xff]
    %v934 = vld [vmem:[#allocation15 + $0x78] sm:$0xff]
    %v935 = vld [vmem:[#allocation15 + $0x80] sm:$0xff]
    %v936 = vld [vmem:[#allocation15 + $0x88] sm:$0xff]
    %v937 = vld [vmem:[#allocation15 + $0x90] sm:$0xff]
    %v938 = vld [vmem:[#allocation15 + $0x98] sm:$0xff]
    %v939 = vld [vmem:[#allocation15 + $0xa0] sm:$0xff]
    %v940 = vld [vmem:[#allocation15 + $0xa8] sm:$0xff]
    %v941 = vld [vmem:[#allocation15 + $0xb0] sm:$0xff]
    %v942 = vld [vmem:[#allocation15 + $0xb8] sm:$0xff]
    %v943 = vld [vmem:[#allocation15 + $0xc0] sm:$0xff]
    %v944 = vld [vmem:[#allocation15 + $0xc8] sm:$0xff]
    %v945 = vld [vmem:[#allocation15 + $0xd0] sm:$0xff]
    %v946 = vld [vmem:[#allocation15 + $0xd8] sm:$0xff]
    %v947 = vld [vmem:[#allocation15 + $0xe0] sm:$0xff]
    %v948 = vld [vmem:[#allocation15 + $0xe8] sm:$0xff]
    %v949 = vld [vmem:[#allocation15 + $0xf0] sm:$0xff]
    %v950 = vld [vmem:[#allocation15 + $0xf8] sm:$0xff]
    %v951 = vld [vmem:[#allocation2 + $0x1] sm:$0xff]
    %v952 = vld [vmem:[#allocation2 + $0x9] sm:$0xff]
    %v953 = vld [vmem:[#allocation2 + $0x11] sm:$0xff]
    %v954 = vld [vmem:[#allocation2 + $0x19] sm:$0xff]
    %v955 = vld [vmem:[#allocation2 + $0x29] sm:$0xff]
    %v956 = vld [vmem:[#allocation2 + $0x31] sm:$0xff]
    %v957 = vld [vmem:[#allocation2 + $0x39] sm:$0xff]
    %v958 = vld [vmem:[#allocation2 + $0x41] sm:$0xff]
    %s959 = scalar_lea.vmem [#allocation15], 256
    %v960 = vld [vmem:[%s959] sm:$0xff]
    %v961 = vld [vmem:[%s959 + $0x8] sm:$0xff]
    %v962 = vld [vmem:[%s959 + $0x10] sm:$0xff]
    %v963 = vld [vmem:[%s959 + $0x18] sm:$0xff]
    %v964 = vld [vmem:[%s959 + $0x20] sm:$0xff]
    %v965 = vld [vmem:[%s959 + $0x28] sm:$0xff]
    %v966 = vld [vmem:[%s959 + $0x30] sm:$0xff]
    %v967 = vld [vmem:[%s959 + $0x38] sm:$0xff]
    %v968 = vld [vmem:[%s959 + $0x40] sm:$0xff]
    %v969 = vld [vmem:[%s959 + $0x48] sm:$0xff]
    %v970 = vld [vmem:[%s959 + $0x50] sm:$0xff]
    %v971 = vld [vmem:[%s959 + $0x58] sm:$0xff]
    %v972 = vld [vmem:[%s959 + $0x60] sm:$0xff]
    %v973 = vld [vmem:[%s959 + $0x68] sm:$0xff]
    %v974 = vld [vmem:[%s959 + $0x70] sm:$0xff]
    %v975 = vld [vmem:[%s959 + $0x78] sm:$0xff]
    %v976 = vld [vmem:[%s959 + $0x80] sm:$0xff]
    %v977 = vld [vmem:[%s959 + $0x88] sm:$0xff]
    %v978 = vld [vmem:[%s959 + $0x90] sm:$0xff]
    %v979 = vld [vmem:[%s959 + $0x98] sm:$0xff]
    %v980 = vld [vmem:[%s959 + $0xa0] sm:$0xff]
    %v981 = vld [vmem:[%s959 + $0xa8] sm:$0xff]
    %v982 = vld [vmem:[%s959 + $0xb0] sm:$0xff]
    %v983 = vld [vmem:[%s959 + $0xb8] sm:$0xff]
    %v984 = vld [vmem:[%s959 + $0xc0] sm:$0xff]
    %v985 = vld [vmem:[%s959 + $0xc8] sm:$0xff]
    %v986 = vld [vmem:[%s959 + $0xd0] sm:$0xff]
    %v987 = vld [vmem:[%s959 + $0xd8] sm:$0xff]
    %v988 = vld [vmem:[%s959 + $0xe0] sm:$0xff]
    %v989 = vld [vmem:[%s959 + $0xe8] sm:$0xff]
    %v990 = vld [vmem:[%s959 + $0xf0] sm:$0xff]
    %v991 = vld [vmem:[%s959 + $0xf8] sm:$0xff]
    %992 = vmatpush.msra.mxu0 %v990
    %993 = vmatpush.msra.mxu0 %v988
    %994 = vmatpush.msra.mxu0 %v986
    %995 = vmatpush.msra.mxu0 %v984
    %996 = vmatpush.msra.mxu0 %v982
    %997 = vmatpush.msra.mxu0 %v980
    %998 = vmatpush.msra.mxu0 %v978
    %999 = vmatpush.msra.mxu0 %v976
    %1000 = vmatpush.msra.mxu0 %v974
    %1001 = vmatpush.msra.mxu0 %v972
    %1002 = vmatpush.msra.mxu0 %v970
    %1003 = vmatpush.msra.mxu0 %v968
    %1004 = vmatpush.msra.mxu0 %v966
    %1005 = vmatpush.msra.mxu0 %v964
    %1006 = vmatpush.msra.mxu0 %v962
    %1007 = vmatpush.msra.mxu0 %v960
    %1008 = vmatmul.f32.gmra.mxu0 %v951
    %v1009 = vpop.f32.mrf.mxu0
    %v1010 = vadd.f32 0.0, %v1009
    %1011 = vmatmul.f32.gmra.mxu0 %v952
    %v1012 = vpop.f32.mrf.mxu0
    %v1013 = vadd.f32 0.0, %v1012
    %1014 = vmatmul.f32.gmra.mxu0 %v953
    %v1015 = vpop.f32.mrf.mxu0
    %v1016 = vadd.f32 0.0, %v1015
    %1017 = vmatmul.f32.gmra.mxu0 %v954
    %v1018 = vpop.f32.mrf.mxu0
    %v1019 = vadd.f32 0.0, %v1018
    %1020 = vmatmul.f32.gmra.mxu0 %v955
    %v1021 = vpop.f32.mrf.mxu0
    %v1022 = vadd.f32 0.0, %v1021
    %1023 = vmatmul.f32.gmra.mxu0 %v956
    %v1024 = vpop.f32.mrf.mxu0
    %v1025 = vadd.f32 0.0, %v1024
    %1026 = vmatmul.f32.gmra.mxu0 %v957
    %v1027 = vpop.f32.mrf.mxu0
    %v1028 = vadd.f32 0.0, %v1027
    %1029 = vmatmul.f32.gmra.mxu0 %v958
    %v1030 = vpop.f32.mrf.mxu0
    %v1031 = vadd.f32 0.0, %v1030
    %1032 = vdwg.mxu0
    %1033 = vmatpush.msra.mxu0 %v991
    %1034 = vmatpush.msra.mxu0 %v989
    %1035 = vmatpush.msra.mxu0 %v987
    %1036 = vmatpush.msra.mxu0 %v985
    %1037 = vmatpush.msra.mxu0 %v983
    %1038 = vmatpush.msra.mxu0 %v981
    %1039 = vmatpush.msra.mxu0 %v979
    %1040 = vmatpush.msra.mxu0 %v977
    %1041 = vmatpush.msra.mxu0 %v975
    %1042 = vmatpush.msra.mxu0 %v973
    %1043 = vmatpush.msra.mxu0 %v971
    %1044 = vmatpush.msra.mxu0 %v969
    %1045 = vmatpush.msra.mxu0 %v967
    %1046 = vmatpush.msra.mxu0 %v965
    %1047 = vmatpush.msra.mxu0 %v963
    %1048 = vmatpush.msra.mxu0 %v961
    %1049 = vmatmul.f32.gmra.mxu0 %v951
    %v1050 = vpop.f32.mrf.mxu0
    %v1051 = vadd.f32 0.0, %v1050
    %1052 = vmatmul.f32.gmra.mxu0 %v952
    %v1053 = vpop.f32.mrf.mxu0
    %v1054 = vadd.f32 0.0, %v1053
    %1055 = vmatmul.f32.gmra.mxu0 %v953
    %v1056 = vpop.f32.mrf.mxu0
    %v1057 = vadd.f32 0.0, %v1056
    %1058 = vmatmul.f32.gmra.mxu0 %v954
    %v1059 = vpop.f32.mrf.mxu0
    %v1060 = vadd.f32 0.0, %v1059
    %1061 = vmatmul.f32.gmra.mxu0 %v955
    %v1062 = vpop.f32.mrf.mxu0
    %v1063 = vadd.f32 0.0, %v1062
    %1064 = vmatmul.f32.gmra.mxu0 %v956
    %v1065 = vpop.f32.mrf.mxu0
    %v1066 = vadd.f32 0.0, %v1065
    %1067 = vmatmul.f32.gmra.mxu0 %v957
    %v1068 = vpop.f32.mrf.mxu0
    %v1069 = vadd.f32 0.0, %v1068
    %1070 = vmatmul.f32.gmra.mxu0 %v958
    %v1071 = vpop.f32.mrf.mxu0
    %v1072 = vadd.f32 0.0, %v1071
    %1073 = vdwg.mxu0
    %1074 = vmatpush.msra.mxu0 %v949
    %1075 = vmatpush.msra.mxu0 %v947
    %1076 = vmatpush.msra.mxu0 %v945
    %1077 = vmatpush.msra.mxu0 %v943
    %1078 = vmatpush.msra.mxu0 %v941
    %1079 = vmatpush.msra.mxu0 %v939
    %1080 = vmatpush.msra.mxu0 %v937
    %1081 = vmatpush.msra.mxu0 %v935
    %1082 = vmatpush.msra.mxu0 %v933
    %1083 = vmatpush.msra.mxu0 %v931
    %1084 = vmatpush.msra.mxu0 %v929
    %1085 = vmatpush.msra.mxu0 %v927
    %1086 = vmatpush.msra.mxu0 %v925
    %1087 = vmatpush.msra.mxu0 %v923
    %1088 = vmatpush.msra.mxu0 %v921
    %1089 = vmatpush.msra.mxu0 %v919
    %1090 = vmatmul.f32.gmra.mxu0 %v911
    %v1091 = vpop.f32.mrf.mxu0
    %v1092 = vadd.f32 %v1010, %v1091
    %1093 = vmatmul.f32.gmra.mxu0 %v912
    %v1094 = vpop.f32.mrf.mxu0
    %v1095 = vadd.f32 %v1013, %v1094
    %1096 = vmatmul.f32.gmra.mxu0 %v913
    %v1097 = vpop.f32.mrf.mxu0
    %v1098 = vadd.f32 %v1016, %v1097
    %1099 = vmatmul.f32.gmra.mxu0 %v914
    %v1100 = vpop.f32.mrf.mxu0
    %v1101 = vadd.f32 %v1019, %v1100
    %1102 = vmatmul.f32.gmra.mxu0 %v915
    %v1103 = vpop.f32.mrf.mxu0
    %v1104 = vadd.f32 %v1022, %v1103
    %1105 = vmatmul.f32.gmra.mxu0 %v916
    %v1106 = vpop.f32.mrf.mxu0
    %v1107 = vadd.f32 %v1025, %v1106
    %1108 = vmatmul.f32.gmra.mxu0 %v917
    %v1109 = vpop.f32.mrf.mxu0
    %v1110 = vadd.f32 %v1028, %v1109
    %1111 = vmatmul.f32.gmra.mxu0 %v918
    %v1112 = vpop.f32.mrf.mxu0
    %v1113 = vadd.f32 %v1031, %v1112
    %1114 = vdwg.mxu0
    %1115 = vmatpush.msra.mxu0 %v950
    %1116 = vmatpush.msra.mxu0 %v948
    %1117 = vmatpush.msra.mxu0 %v946
    %1118 = vmatpush.msra.mxu0 %v944
    %1119 = vmatpush.msra.mxu0 %v942
    %1120 = vmatpush.msra.mxu0 %v940
    %1121 = vmatpush.msra.mxu0 %v938
    %1122 = vmatpush.msra.mxu0 %v936
    %1123 = vmatpush.msra.mxu0 %v934
    %1124 = vmatpush.msra.mxu0 %v932
    %1125 = vmatpush.msra.mxu0 %v930
    %1126 = vmatpush.msra.mxu0 %v928
    %1127 = vmatpush.msra.mxu0 %v926
    %1128 = vmatpush.msra.mxu0 %v924
    %1129 = vmatpush.msra.mxu0 %v922
    %1130 = vmatpush.msra.mxu0 %v920
    %1131 = vmatmul.f32.gmra.mxu0 %v911
    %v1132 = vpop.f32.mrf.mxu0
    %v1133 = vadd.f32 %v1051, %v1132
    %1134 = vmatmul.f32.gmra.mxu0 %v912
    %v1135 = vpop.f32.mrf.mxu0
    %v1136 = vadd.f32 %v1054, %v1135
    %1137 = vmatmul.f32.gmra.mxu0 %v913
    %v1138 = vpop.f32.mrf.mxu0
    %v1139 = vadd.f32 %v1057, %v1138
    %1140 = vmatmul.f32.gmra.mxu0 %v914
    %v1141 = vpop.f32.mrf.mxu0
    %v1142 = vadd.f32 %v1060, %v1141
    %1143 = vmatmul.f32.gmra.mxu0 %v915
    %v1144 = vpop.f32.mrf.mxu0
    %v1145 = vadd.f32 %v1063, %v1144
    %1146 = vmatmul.f32.gmra.mxu0 %v916
    %v1147 = vpop.f32.mrf.mxu0
    %v1148 = vadd.f32 %v1066, %v1147
    %1149 = vmatmul.f32.gmra.mxu0 %v917
    %v1150 = vpop.f32.mrf.mxu0
    %v1151 = vadd.f32 %v1069, %v1150
    %1152 = vmatmul.f32.gmra.mxu0 %v918
    %v1153 = vpop.f32.mrf.mxu0
    %v1154 = vadd.f32 %v1072, %v1153
    %1155 = vdwg.mxu0
    %v1156 = vld [vmem:[#allocation2 + $0x2] sm:$0xff]
    %v1157 = vld [vmem:[#allocation2 + $0xa] sm:$0xff]
    %v1158 = vld [vmem:[#allocation2 + $0x12] sm:$0xff]
    %v1159 = vld [vmem:[#allocation2 + $0x1a] sm:$0xff]
    %v1160 = vld [vmem:[#allocation2 + $0x2a] sm:$0xff]
    %v1161 = vld [vmem:[#allocation2 + $0x32] sm:$0xff]
    %v1162 = vld [vmem:[#allocation2 + $0x3a] sm:$0xff]
    %v1163 = vld [vmem:[#allocation2 + $0x42] sm:$0xff]
    %s1164 = scalar_lea.vmem [#allocation15], 512
    %v1165 = vld [vmem:[%s1164] sm:$0xff]
    %v1166 = vld [vmem:[%s1164 + $0x8] sm:$0xff]
    %v1167 = vld [vmem:[%s1164 + $0x10] sm:$0xff]
    %v1168 = vld [vmem:[%s1164 + $0x18] sm:$0xff]
    %v1169 = vld [vmem:[%s1164 + $0x20] sm:$0xff]
    %v1170 = vld [vmem:[%s1164 + $0x28] sm:$0xff]
    %v1171 = vld [vmem:[%s1164 + $0x30] sm:$0xff]
    %v1172 = vld [vmem:[%s1164 + $0x38] sm:$0xff]
    %v1173 = vld [vmem:[%s1164 + $0x40] sm:$0xff]
    %v1174 = vld [vmem:[%s1164 + $0x48] sm:$0xff]
    %v1175 = vld [vmem:[%s1164 + $0x50] sm:$0xff]
    %v1176 = vld [vmem:[%s1164 + $0x58] sm:$0xff]
    %v1177 = vld [vmem:[%s1164 + $0x60] sm:$0xff]
    %v1178 = vld [vmem:[%s1164 + $0x68] sm:$0xff]
    %v1179 = vld [vmem:[%s1164 + $0x70] sm:$0xff]
    %v1180 = vld [vmem:[%s1164 + $0x78] sm:$0xff]
    %v1181 = vld [vmem:[%s1164 + $0x80] sm:$0xff]
    %v1182 = vld [vmem:[%s1164 + $0x88] sm:$0xff]
    %v1183 = vld [vmem:[%s1164 + $0x90] sm:$0xff]
    %v1184 = vld [vmem:[%s1164 + $0x98] sm:$0xff]
    %v1185 = vld [vmem:[%s1164 + $0xa0] sm:$0xff]
    %v1186 = vld [vmem:[%s1164 + $0xa8] sm:$0xff]
    %v1187 = vld [vmem:[%s1164 + $0xb0] sm:$0xff]
    %v1188 = vld [vmem:[%s1164 + $0xb8] sm:$0xff]
    %v1189 = vld [vmem:[%s1164 + $0xc0] sm:$0xff]
    %v1190 = vld [vmem:[%s1164 + $0xc8] sm:$0xff]
    %v1191 = vld [vmem:[%s1164 + $0xd0] sm:$0xff]
    %v1192 = vld [vmem:[%s1164 + $0xd8] sm:$0xff]
    %v1193 = vld [vmem:[%s1164 + $0xe0] sm:$0xff]
    %v1194 = vld [vmem:[%s1164 + $0xe8] sm:$0xff]
    %v1195 = vld [vmem:[%s1164 + $0xf0] sm:$0xff]
    %v1196 = vld [vmem:[%s1164 + $0xf8] sm:$0xff]
    %1197 = vmatpush.msra.mxu0 %v1195
    %1198 = vmatpush.msra.mxu0 %v1193
    %1199 = vmatpush.msra.mxu0 %v1191
    %1200 = vmatpush.msra.mxu0 %v1189
    %1201 = vmatpush.msra.mxu0 %v1187
    %1202 = vmatpush.msra.mxu0 %v1185
    %1203 = vmatpush.msra.mxu0 %v1183
    %1204 = vmatpush.msra.mxu0 %v1181
    %1205 = vmatpush.msra.mxu0 %v1179
    %1206 = vmatpush.msra.mxu0 %v1177
    %1207 = vmatpush.msra.mxu0 %v1175
    %1208 = vmatpush.msra.mxu0 %v1173
    %1209 = vmatpush.msra.mxu0 %v1171
    %1210 = vmatpush.msra.mxu0 %v1169
    %1211 = vmatpush.msra.mxu0 %v1167
    %1212 = vmatpush.msra.mxu0 %v1165
    %1213 = vmatmul.f32.gmra.mxu0 %v1156
    %v1214 = vpop.f32.mrf.mxu0
    %v1215 = vadd.f32 0.0, %v1214
    %1216 = vmatmul.f32.gmra.mxu0 %v1157
    %v1217 = vpop.f32.mrf.mxu0
    %v1218 = vadd.f32 0.0, %v1217
    %1219 = vmatmul.f32.gmra.mxu0 %v1158
    %v1220 = vpop.f32.mrf.mxu0
    %v1221 = vadd.f32 0.0, %v1220
    %1222 = vmatmul.f32.gmra.mxu0 %v1159
    %v1223 = vpop.f32.mrf.mxu0
    %v1224 = vadd.f32 0.0, %v1223
    %1225 = vmatmul.f32.gmra.mxu0 %v1160
    %v1226 = vpop.f32.mrf.mxu0
    %v1227 = vadd.f32 0.0, %v1226
    %1228 = vmatmul.f32.gmra.mxu0 %v1161
    %v1229 = vpop.f32.mrf.mxu0
    %v1230 = vadd.f32 0.0, %v1229
    %1231 = vmatmul.f32.gmra.mxu0 %v1162
    %v1232 = vpop.f32.mrf.mxu0
    %v1233 = vadd.f32 0.0, %v1232
    %1234 = vmatmul.f32.gmra.mxu0 %v1163
    %v1235 = vpop.f32.mrf.mxu0
    %v1236 = vadd.f32 0.0, %v1235
    %1237 = vdwg.mxu0
    %1238 = vmatpush.msra.mxu0 %v1196
    %1239 = vmatpush.msra.mxu0 %v1194
    %1240 = vmatpush.msra.mxu0 %v1192
    %1241 = vmatpush.msra.mxu0 %v1190
    %1242 = vmatpush.msra.mxu0 %v1188
    %1243 = vmatpush.msra.mxu0 %v1186
    %1244 = vmatpush.msra.mxu0 %v1184
    %1245 = vmatpush.msra.mxu0 %v1182
    %1246 = vmatpush.msra.mxu0 %v1180
    %1247 = vmatpush.msra.mxu0 %v1178
    %1248 = vmatpush.msra.mxu0 %v1176
    %1249 = vmatpush.msra.mxu0 %v1174
    %1250 = vmatpush.msra.mxu0 %v1172
    %1251 = vmatpush.msra.mxu0 %v1170
    %1252 = vmatpush.msra.mxu0 %v1168
    %1253 = vmatpush.msra.mxu0 %v1166
    %1254 = vmatmul.f32.gmra.mxu0 %v1156
    %v1255 = vpop.f32.mrf.mxu0
    %v1256 = vadd.f32 0.0, %v1255
    %1257 = vmatmul.f32.gmra.mxu0 %v1157
    %v1258 = vpop.f32.mrf.mxu0
    %v1259 = vadd.f32 0.0, %v1258
    %1260 = vmatmul.f32.gmra.mxu0 %v1158
    %v1261 = vpop.f32.mrf.mxu0
    %v1262 = vadd.f32 0.0, %v1261
    %1263 = vmatmul.f32.gmra.mxu0 %v1159
    %v1264 = vpop.f32.mrf.mxu0
    %v1265 = vadd.f32 0.0, %v1264
    %1266 = vmatmul.f32.gmra.mxu0 %v1160
    %v1267 = vpop.f32.mrf.mxu0
    %v1268 = vadd.f32 0.0, %v1267
    %1269 = vmatmul.f32.gmra.mxu0 %v1161
    %v1270 = vpop.f32.mrf.mxu0
    %v1271 = vadd.f32 0.0, %v1270
    %1272 = vmatmul.f32.gmra.mxu0 %v1162
    %v1273 = vpop.f32.mrf.mxu0
    %v1274 = vadd.f32 0.0, %v1273
    %1275 = vmatmul.f32.gmra.mxu0 %v1163
    %v1276 = vpop.f32.mrf.mxu0
    %v1277 = vadd.f32 0.0, %v1276
    %1278 = vdwg.mxu0
    %v1279 = vadd.f32 %v1092, %v1215
    %v1280 = vadd.f32 %v1133, %v1256
    %v1281 = vadd.f32 %v1095, %v1218
    %v1282 = vadd.f32 %v1136, %v1259
    %v1283 = vadd.f32 %v1098, %v1221
    %v1284 = vadd.f32 %v1139, %v1262
    %v1285 = vadd.f32 %v1101, %v1224
    %v1286 = vadd.f32 %v1142, %v1265
    %v1287 = vadd.f32 %v1104, %v1227
    %v1288 = vadd.f32 %v1145, %v1268
    %v1289 = vadd.f32 %v1107, %v1230
    %v1290 = vadd.f32 %v1148, %v1271
    %v1291 = vadd.f32 %v1110, %v1233
    %v1292 = vadd.f32 %v1151, %v1274
    %v1293 = vadd.f32 %v1113, %v1236
    %v1294 = vadd.f32 %v1154, %v1277
    %v1295 = vadd.f32 %v1279, %v1281
    %v1296 = vadd.f32 %v1295, %v1283
    %v1297 = vadd.f32 %v1296, %v1285
    %v1298 = vadd.f32 %v1297, %v1287
    %v1299 = vadd.f32 %v1298, %v1289
    %v1300 = vadd.f32 %v1299, %v1291
    %v1301 = vadd.f32 %v1300, %v1293
    %v1302 = vrot.slane %v1301, 4
    %v1303 = vadd.f32 %v1301, %v1302
    %v1304 = vrot.slane %v1303, 2
    %v1305 = vadd.f32 %v1303, %v1304
    %v1306 = vrot.slane %v1305, 1
    %v1307 = vadd.f32 %v1305, %v1306
    %v1308 = vadd.f32 %v1280, %v1282
    %v1309 = vadd.f32 %v1308, %v1284
    %v1310 = vadd.f32 %v1309, %v1286
    %v1311 = vadd.f32 %v1310, %v1288
    %v1312 = vadd.f32 %v1311, %v1290
    %v1313 = vadd.f32 %v1312, %v1292
    %v1314 = vadd.f32 %v1313, %v1294
    %v1315 = vrot.slane %v1314, 4
    %v1316 = vadd.f32 %v1314, %v1315
    %v1317 = vrot.slane %v1316, 2
    %v1318 = vadd.f32 %v1316, %v1317
    %v1319 = vrot.slane %v1318, 1
    %v1320 = vadd.f32 %v1318, %v1319
    %v1321 = vmul.f32 %v1279, %v1279
    %v1322 = vmul.f32 %v1280, %v1280
    %v1323 = vmul.f32 %v1281, %v1281
    %v1324 = vmul.f32 %v1282, %v1282
    %v1325 = vmul.f32 %v1283, %v1283
    %v1326 = vmul.f32 %v1284, %v1284
    %v1327 = vmul.f32 %v1285, %v1285
    %v1328 = vmul.f32 %v1286, %v1286
    %v1329 = vmul.f32 %v1287, %v1287
    %v1330 = vmul.f32 %v1288, %v1288
    %v1331 = vmul.f32 %v1289, %v1289
    %v1332 = vmul.f32 %v1290, %v1290
    %v1333 = vmul.f32 %v1291, %v1291
    %v1334 = vmul.f32 %v1292, %v1292
    %v1335 = vmul.f32 %v1293, %v1293
    %v1336 = vmul.f32 %v1294, %v1294
    %v1337 = vadd.f32 %v1321, %v1323
    %v1338 = vadd.f32 %v1337, %v1325
    %v1339 = vadd.f32 %v1338, %v1327
    %v1340 = vadd.f32 %v1339, %v1329
    %v1341 = vadd.f32 %v1340, %v1331
    %v1342 = vadd.f32 %v1341, %v1333
    %v1343 = vadd.f32 %v1342, %v1335
    %v1344 = vrot.slane %v1343, 4
    %v1345 = vadd.f32 %v1343, %v1344
    %v1346 = vrot.slane %v1345, 2
    %v1347 = vadd.f32 %v1345, %v1346
    %v1348 = vrot.slane %v1347, 1
    %v1349 = vadd.f32 %v1347, %v1348
    %v1350 = vadd.f32 %v1322, %v1324
    %v1351 = vadd.f32 %v1350, %v1326
    %v1352 = vadd.f32 %v1351, %v1328
    %v1353 = vadd.f32 %v1352, %v1330
    %v1354 = vadd.f32 %v1353, %v1332
    %v1355 = vadd.f32 %v1354, %v1334
    %v1356 = vadd.f32 %v1355, %v1336
    %v1357 = vrot.slane %v1356, 4
    %v1358 = vadd.f32 %v1356, %v1357
    %v1359 = vrot.slane %v1358, 2
    %v1360 = vadd.f32 %v1358, %v1359
    %v1361 = vrot.slane %v1360, 1
    %v1362 = vadd.f32 %v1360, %v1361
    %v1363 = vld [vmem:[#allocation17] sm:$0xff]
    %v1364 = vld [vmem:[#allocation17 + $0x8] sm:$0xff]
    %v1365 = vld [vmem:[#allocation17 + $0x10] sm:$0xff]
    %v1366 = vld [vmem:[#allocation17 + $0x18] sm:$0xff]
    %v1367 = vld [vmem:[#allocation17 + $0x20] sm:$0xff]
    %v1368 = vld [vmem:[#allocation17 + $0x28] sm:$0xff]
    %v1369 = vld [vmem:[#allocation17 + $0x30] sm:$0xff]
    %v1370 = vld [vmem:[#allocation17 + $0x38] sm:$0xff]
    %v1371 = vld [vmem:[#allocation17 + $0x40] sm:$0xff]
    %v1372 = vld [vmem:[#allocation17 + $0x48] sm:$0xff]
    %v1373 = vld [vmem:[#allocation17 + $0x50] sm:$0xff]
    %v1374 = vld [vmem:[#allocation17 + $0x58] sm:$0xff]
    %v1375 = vld [vmem:[#allocation17 + $0x60] sm:$0xff]
    %v1376 = vld [vmem:[#allocation17 + $0x68] sm:$0xff]
    %v1377 = vld [vmem:[#allocation17 + $0x70] sm:$0xff]
    %v1378 = vld [vmem:[#allocation17 + $0x78] sm:$0xff]
    %v1379 = vld [vmem:[#allocation17 + $0x80] sm:$0xff]
    %v1380 = vld [vmem:[#allocation17 + $0x88] sm:$0xff]
    %v1381 = vld [vmem:[#allocation17 + $0x90] sm:$0xff]
    %v1382 = vld [vmem:[#allocation17 + $0x98] sm:$0xff]
    %v1383 = vld [vmem:[#allocation17 + $0xa0] sm:$0xff]
    %v1384 = vld [vmem:[#allocation17 + $0xa8] sm:$0xff]
    %v1385 = vld [vmem:[#allocation17 + $0xb0] sm:$0xff]
    %v1386 = vld [vmem:[#allocation17 + $0xb8] sm:$0xff]
    %v1387 = vld [vmem:[#allocation17 + $0xc0] sm:$0xff]
    %v1388 = vld [vmem:[#allocation17 + $0xc8] sm:$0xff]
    %v1389 = vld [vmem:[#allocation17 + $0xd0] sm:$0xff]
    %v1390 = vld [vmem:[#allocation17 + $0xd8] sm:$0xff]
    %v1391 = vld [vmem:[#allocation17 + $0xe0] sm:$0xff]
    %v1392 = vld [vmem:[#allocation17 + $0xe8] sm:$0xff]
    %v1393 = vld [vmem:[#allocation17 + $0xf0] sm:$0xff]
    %v1394 = vld [vmem:[#allocation17 + $0xf8] sm:$0xff]
    %v1395 = vld [vmem:[#allocation17 + $0x100] sm:$0xff]
    %v1396 = vld [vmem:[#allocation17 + $0x108] sm:$0xff]
    %v1397 = vld [vmem:[#allocation17 + $0x110] sm:$0xff]
    %v1398 = vld [vmem:[#allocation17 + $0x118] sm:$0xff]
    %v1399 = vld [vmem:[#allocation17 + $0x120] sm:$0xff]
    %v1400 = vld [vmem:[#allocation17 + $0x128] sm:$0xff]
    %v1401 = vld [vmem:[#allocation17 + $0x130] sm:$0xff]
    %v1402 = vld [vmem:[#allocation17 + $0x138] sm:$0xff]
    %v1403 = vld [vmem:[#allocation17 + $0x140] sm:$0xff]
    %v1404 = vld [vmem:[#allocation17 + $0x148] sm:$0xff]
    %v1405 = vld [vmem:[#allocation17 + $0x150] sm:$0xff]
    %v1406 = vld [vmem:[#allocation17 + $0x158] sm:$0xff]
    %v1407 = vld [vmem:[#allocation17 + $0x160] sm:$0xff]
    %v1408 = vld [vmem:[#allocation17 + $0x168] sm:$0xff]
    %v1409 = vld [vmem:[#allocation17 + $0x170] sm:$0xff]
    %v1410 = vld [vmem:[#allocation17 + $0x178] sm:$0xff]
    %v1411 = vld [vmem:[#allocation17 + $0x180] sm:$0xff]
    %v1412 = vld [vmem:[#allocation17 + $0x188] sm:$0xff]
    %v1413 = vld [vmem:[#allocation17 + $0x190] sm:$0xff]
    %v1414 = vld [vmem:[#allocation17 + $0x198] sm:$0xff]
    %v1415 = vld [vmem:[#allocation17 + $0x1a0] sm:$0xff]
    %v1416 = vld [vmem:[#allocation17 + $0x1a8] sm:$0xff]
    %v1417 = vld [vmem:[#allocation17 + $0x1b0] sm:$0xff]
    %v1418 = vld [vmem:[#allocation17 + $0x1b8] sm:$0xff]
    %v1419 = vld [vmem:[#allocation17 + $0x1c0] sm:$0xff]
    %v1420 = vld [vmem:[#allocation17 + $0x1c8] sm:$0xff]
    %v1421 = vld [vmem:[#allocation17 + $0x1d0] sm:$0xff]
    %v1422 = vld [vmem:[#allocation17 + $0x1d8] sm:$0xff]
    %v1423 = vld [vmem:[#allocation17 + $0x1e0] sm:$0xff]
    %v1424 = vld [vmem:[#allocation17 + $0x1e8] sm:$0xff]
    %v1425 = vld [vmem:[#allocation17 + $0x1f0] sm:$0xff]
    %v1426 = vld [vmem:[#allocation17 + $0x1f8] sm:$0xff]
    %1427 = vmatpush.msra.mxu0 %v1393
    %1428 = vmatpush.msra.mxu0 %v1391
    %1429 = vmatpush.msra.mxu0 %v1389
    %1430 = vmatpush.msra.mxu0 %v1387
    %1431 = vmatpush.msra.mxu0 %v1385
    %1432 = vmatpush.msra.mxu0 %v1383
    %1433 = vmatpush.msra.mxu0 %v1381
    %1434 = vmatpush.msra.mxu0 %v1379
    %1435 = vmatpush.msra.mxu0 %v1377
    %1436 = vmatpush.msra.mxu0 %v1375
    %1437 = vmatpush.msra.mxu0 %v1373
    %1438 = vmatpush.msra.mxu0 %v1371
    %1439 = vmatpush.msra.mxu0 %v1369
    %1440 = vmatpush.msra.mxu0 %v1367
    %1441 = vmatpush.msra.mxu0 %v1365
    %1442 = vmatpush.msra.mxu0 %v1363
    %1443 = vmatmul.f32.gmra.mxu0 %v1307
    %v1444 = vpop.f32.mrf.mxu0
    %v1445 = vadd.f32 0.0, %v1444
    %1446 = vdwg.mxu0
    %1447 = vmatpush.msra.mxu0 %v1425
    %1448 = vmatpush.msra.mxu0 %v1423
    %1449 = vmatpush.msra.mxu0 %v1421
    %1450 = vmatpush.msra.mxu0 %v1419
    %1451 = vmatpush.msra.mxu0 %v1417
    %1452 = vmatpush.msra.mxu0 %v1415
    %1453 = vmatpush.msra.mxu0 %v1413
    %1454 = vmatpush.msra.mxu0 %v1411
    %1455 = vmatpush.msra.mxu0 %v1409
    %1456 = vmatpush.msra.mxu0 %v1407
    %1457 = vmatpush.msra.mxu0 %v1405
    %1458 = vmatpush.msra.mxu0 %v1403
    %1459 = vmatpush.msra.mxu0 %v1401
    %1460 = vmatpush.msra.mxu0 %v1399
    %1461 = vmatpush.msra.mxu0 %v1397
    %1462 = vmatpush.msra.mxu0 %v1395
    %1463 = vmatmul.f32.gmra.mxu0 %v1320
    %v1464 = vpop.f32.mrf.mxu0
    %v1465 = vadd.f32 %v1445, %v1464
    %1466 = vdwg.mxu0
    %1467 = vmatpush.msra.mxu0 %v1394
    %1468 = vmatpush.msra.mxu0 %v1392
    %1469 = vmatpush.msra.mxu0 %v1390
    %1470 = vmatpush.msra.mxu0 %v1388
    %1471 = vmatpush.msra.mxu0 %v1386
    %1472 = vmatpush.msra.mxu0 %v1384
    %1473 = vmatpush.msra.mxu0 %v1382
    %1474 = vmatpush.msra.mxu0 %v1380
    %1475 = vmatpush.msra.mxu0 %v1378
    %1476 = vmatpush.msra.mxu0 %v1376
    %1477 = vmatpush.msra.mxu0 %v1374
    %1478 = vmatpush.msra.mxu0 %v1372
    %1479 = vmatpush.msra.mxu0 %v1370
    %1480 = vmatpush.msra.mxu0 %v1368
    %1481 = vmatpush.msra.mxu0 %v1366
    %1482 = vmatpush.msra.mxu0 %v1364
    %1483 = vmatmul.f32.gmra.mxu0 %v1307
    %v1484 = vpop.f32.mrf.mxu0
    %v1485 = vadd.f32 0.0, %v1484
    %1486 = vdwg.mxu0
    %1487 = vmatpush.msra.mxu0 %v1426
    %1488 = vmatpush.msra.mxu0 %v1424
    %1489 = vmatpush.msra.mxu0 %v1422
    %1490 = vmatpush.msra.mxu0 %v1420
    %1491 = vmatpush.msra.mxu0 %v1418
    %1492 = vmatpush.msra.mxu0 %v1416
    %1493 = vmatpush.msra.mxu0 %v1414
    %1494 = vmatpush.msra.mxu0 %v1412
    %1495 = vmatpush.msra.mxu0 %v1410
    %1496 = vmatpush.msra.mxu0 %v1408
    %1497 = vmatpush.msra.mxu0 %v1406
    %1498 = vmatpush.msra.mxu0 %v1404
    %1499 = vmatpush.msra.mxu0 %v1402
    %1500 = vmatpush.msra.mxu0 %v1400
    %1501 = vmatpush.msra.mxu0 %v1398
    %1502 = vmatpush.msra.mxu0 %v1396
    %1503 = vmatmul.f32.gmra.mxu0 %v1320
    %v1504 = vpop.f32.mrf.mxu0
    %v1505 = vadd.f32 %v1485, %v1504
    %1506 = vdwg.mxu0
    %1507 = vmatpush.msra.mxu0 %v1393
    %1508 = vmatpush.msra.mxu0 %v1391
    %1509 = vmatpush.msra.mxu0 %v1389
    %1510 = vmatpush.msra.mxu0 %v1387
    %1511 = vmatpush.msra.mxu0 %v1385
    %1512 = vmatpush.msra.mxu0 %v1383
    %1513 = vmatpush.msra.mxu0 %v1381
    %1514 = vmatpush.msra.mxu0 %v1379
    %1515 = vmatpush.msra.mxu0 %v1377
    %1516 = vmatpush.msra.mxu0 %v1375
    %1517 = vmatpush.msra.mxu0 %v1373
    %1518 = vmatpush.msra.mxu0 %v1371
    %1519 = vmatpush.msra.mxu0 %v1369
    %1520 = vmatpush.msra.mxu0 %v1367
    %1521 = vmatpush.msra.mxu0 %v1365
    %1522 = vmatpush.msra.mxu0 %v1363
    %1523 = vmatmul.f32.gmra.mxu0 %v1349
    %v1524 = vpop.f32.mrf.mxu0
    %v1525 = vadd.f32 0.0, %v1524
    %1526 = vdwg.mxu0
    %1527 = vmatpush.msra.mxu0 %v1425
    %1528 = vmatpush.msra.mxu0 %v1423
    %1529 = vmatpush.msra.mxu0 %v1421
    %1530 = vmatpush.msra.mxu0 %v1419
    %1531 = vmatpush.msra.mxu0 %v1417
    %1532 = vmatpush.msra.mxu0 %v1415
    %1533 = vmatpush.msra.mxu0 %v1413
    %1534 = vmatpush.msra.mxu0 %v1411
    %1535 = vmatpush.msra.mxu0 %v1409
    %1536 = vmatpush.msra.mxu0 %v1407
    %1537 = vmatpush.msra.mxu0 %v1405
    %1538 = vmatpush.msra.mxu0 %v1403
    %1539 = vmatpush.msra.mxu0 %v1401
    %1540 = vmatpush.msra.mxu0 %v1399
    %1541 = vmatpush.msra.mxu0 %v1397
    %1542 = vmatpush.msra.mxu0 %v1395
    %1543 = vmatmul.f32.gmra.mxu0 %v1362
    %v1544 = vpop.f32.mrf.mxu0
    %v1545 = vadd.f32 %v1525, %v1544
    %1546 = vdwg.mxu0
    %1547 = vmatpush.msra.mxu0 %v1394
    %1548 = vmatpush.msra.mxu0 %v1392
    %1549 = vmatpush.msra.mxu0 %v1390
    %1550 = vmatpush.msra.mxu0 %v1388
    %1551 = vmatpush.msra.mxu0 %v1386
    %1552 = vmatpush.msra.mxu0 %v1384
    %1553 = vmatpush.msra.mxu0 %v1382
    %1554 = vmatpush.msra.mxu0 %v1380
    %1555 = vmatpush.msra.mxu0 %v1378
    %1556 = vmatpush.msra.mxu0 %v1376
    %1557 = vmatpush.msra.mxu0 %v1374
    %1558 = vmatpush.msra.mxu0 %v1372
    %1559 = vmatpush.msra.mxu0 %v1370
    %1560 = vmatpush.msra.mxu0 %v1368
    %1561 = vmatpush.msra.mxu0 %v1366
    %1562 = vmatpush.msra.mxu0 %v1364
    %1563 = vmatmul.f32.gmra.mxu0 %v1349
    %v1564 = vpop.f32.mrf.mxu0
    %v1565 = vadd.f32 0.0, %v1564
    %1566 = vdwg.mxu0
    %1567 = vmatpush.msra.mxu0 %v1426
    %1568 = vmatpush.msra.mxu0 %v1424
    %1569 = vmatpush.msra.mxu0 %v1422
    %1570 = vmatpush.msra.mxu0 %v1420
    %1571 = vmatpush.msra.mxu0 %v1418
    %1572 = vmatpush.msra.mxu0 %v1416
    %1573 = vmatpush.msra.mxu0 %v1414
    %1574 = vmatpush.msra.mxu0 %v1412
    %1575 = vmatpush.msra.mxu0 %v1410
    %1576 = vmatpush.msra.mxu0 %v1408
    %1577 = vmatpush.msra.mxu0 %v1406
    %1578 = vmatpush.msra.mxu0 %v1404
    %1579 = vmatpush.msra.mxu0 %v1402
    %1580 = vmatpush.msra.mxu0 %v1400
    %1581 = vmatpush.msra.mxu0 %v1398
    %1582 = vmatpush.msra.mxu0 %v1396
    %1583 = vmatmul.f32.gmra.mxu0 %v1362
    %v1584 = vpop.f32.mrf.mxu0
    %v1585 = vadd.f32 %v1565, %v1584
    %1586 = vdwg.mxu0
    %v1587 = vmul.f32 %v1465, %v1465
    %v1588 = vmul.f32 %v1505, %v1505
    %v1589 = vsub.f32 %v1545, %v1587
    %v1590 = vsub.f32 %v1585, %v1588
    %v1591 = vmax.f32 %v1589, 0.0
    %v1592 = vmax.f32 %v1590, 0.0
    %v1593 = vld [vmem:[%s11] sm:$0x3]
    %v1594 = vadd.f32 %v1591, 1e-05
    %v1595 = vadd.f32 %v1592, 1e-05
    %v1596 = vrsqrt.pop %v1594
    %v1597 = vmul.f32 %v1596, %v1594
    %v1598 = vmul.f32 %v1597, %v1596
    %v1599 = vmul.f32 0.5, %v1598
    %v1600 = vsub.f32 1.5, %v1599
    %v1601 = vmul.f32 %v1596, %v1600
    %vm1602 = vweird.f32 %v1594
    %vm1603 = vweird.f32 %v1596
    %vm1604 = vmor %vm1602, %vm1603
    %v1605 = vsel %vm1604, %v1596, %v1601
    %v1606 = vrsqrt.pop %v1595
    %v1607 = vmul.f32 %v1606, %v1595
    %v1608 = vmul.f32 %v1607, %v1606
    %v1609 = vmul.f32 0.5, %v1608
    %v1610 = vsub.f32 1.5, %v1609
    %v1611 = vmul.f32 %v1606, %v1610
    %vm1612 = vweird.f32 %v1595
    %vm1613 = vweird.f32 %v1606
    %vm1614 = vmor %vm1612, %vm1613
    %v1615 = vsel %vm1614, %v1606, %v1611
    %v1618 = vrot.slane %v1615, 7
    %vm1619 = vcmask 1040384
    %v1620 = vsel %vm1619, %v1605, %v1618
    %v1622 = vmul.f32 %v1593, %v1620
    %v1623 = vld [vmem:[%s12] sm:$0x3]
    %v1625 = vperm.slane %v1622, 0
    %v1626 = vperm.slane %v1622, 1
    %v1629 = vmul.f32 %v1465, %v1625
    %v1630 = vmul.f32 %v1505, %v1626
    %v1633 = vrot.slane %v1630, 7
    %v1634 = vsel %vm1619, %v1629, %v1633
    %v1636 = vsub.f32 %v1623, %v1634
    %v1637 = vmul.f32 %v1279, %v1625
    %v1638 = vmul.f32 %v1280, %v1626
    %v1639 = vmul.f32 %v1281, %v1625
    %v1640 = vmul.f32 %v1282, %v1626
    %v1641 = vmul.f32 %v1283, %v1625
    %v1642 = vmul.f32 %v1284, %v1626
    %v1643 = vmul.f32 %v1285, %v1625
    %v1644 = vmul.f32 %v1286, %v1626
    %v1645 = vmul.f32 %v1287, %v1625
    %v1646 = vmul.f32 %v1288, %v1626
    %v1647 = vmul.f32 %v1289, %v1625
    %v1648 = vmul.f32 %v1290, %v1626
    %v1649 = vmul.f32 %v1291, %v1625
    %v1650 = vmul.f32 %v1292, %v1626
    %v1651 = vmul.f32 %v1293, %v1625
    %v1652 = vmul.f32 %v1294, %v1626
    %v1654 = vperm.slane %v1636, 0
    %v1655 = vperm.slane %v1636, 1
    %v1658 = vadd.f32 %v1637, %v1654
    %v1659 = vadd.f32 %v1638, %v1655
    %v1660 = vadd.f32 %v1639, %v1654
    %v1661 = vadd.f32 %v1640, %v1655
    %v1662 = vadd.f32 %v1641, %v1654
    %v1663 = vadd.f32 %v1642, %v1655
    %v1664 = vadd.f32 %v1643, %v1654
    %v1665 = vadd.f32 %v1644, %v1655
    %v1666 = vadd.f32 %v1645, %v1654
    %v1667 = vadd.f32 %v1646, %v1655
    %v1668 = vadd.f32 %v1647, %v1654
    %v1669 = vadd.f32 %v1648, %v1655
    %v1670 = vadd.f32 %v1649, %v1654
    %v1671 = vadd.f32 %v1650, %v1655
    %v1672 = vadd.f32 %v1651, %v1654
    %v1673 = vadd.f32 %v1652, %v1655
    %v1674 = vmax.f32 %v1658, 0.0
    %v1675 = vmax.f32 %v1659, 0.0
    %v1676 = vmax.f32 %v1660, 0.0
    %v1677 = vmax.f32 %v1661, 0.0
    %v1678 = vmax.f32 %v1662, 0.0
    %v1679 = vmax.f32 %v1663, 0.0
    %v1680 = vmax.f32 %v1664, 0.0
    %v1681 = vmax.f32 %v1665, 0.0
    %v1682 = vmax.f32 %v1666, 0.0
    %v1683 = vmax.f32 %v1667, 0.0
    %v1684 = vmax.f32 %v1668, 0.0
    %v1685 = vmax.f32 %v1669, 0.0
    %v1686 = vmax.f32 %v1670, 0.0
    %v1687 = vmax.f32 %v1671, 0.0
    %v1688 = vmax.f32 %v1672, 0.0
    %v1689 = vmax.f32 %v1673, 0.0
    %1690 = vst [vmem:[#allocation18] sm:$0xff] %v1674
    %1691 = vst [vmem:[#allocation18 + $0x8] sm:$0xff] %v1675
    %1692 = vst [vmem:[#allocation18 + $0x10] sm:$0xff] %v1676
    %1693 = vst [vmem:[#allocation18 + $0x18] sm:$0xff] %v1677
    %1694 = vst [vmem:[#allocation18 + $0x20] sm:$0xff] %v1678
    %1695 = vst [vmem:[#allocation18 + $0x28] sm:$0xff] %v1679
    %1696 = vst [vmem:[#allocation18 + $0x30] sm:$0xff] %v1680
    %1697 = vst [vmem:[#allocation18 + $0x38] sm:$0xff] %v1681
    %1698 = vst [vmem:[#allocation18 + $0x40] sm:$0xff] %v1682
    %1699 = vst [vmem:[#allocation18 + $0x48] sm:$0xff] %v1683
    %1700 = vst [vmem:[#allocation18 + $0x50] sm:$0xff] %v1684
    %1701 = vst [vmem:[#allocation18 + $0x58] sm:$0xff] %v1685
    %1702 = vst [vmem:[#allocation18 + $0x60] sm:$0xff] %v1686
    %1703 = vst [vmem:[#allocation18 + $0x68] sm:$0xff] %v1687
    %1704 = vst [vmem:[#allocation18 + $0x70] sm:$0xff] %v1688
    %1705 = vst [vmem:[#allocation18 + $0x78] sm:$0xff] %v1689
    // Predicated region
    $region90: #{tpu_custom_call.1} parent=1 // pred_check
      _
    $region91: #{tpu_custom_call.1} parent=1 // pred_check_branch
      %1707 = sbr.rel (0) target = $region93
    $region92: #{tpu_custom_call.1} parent=1 // pred_region
      %1709 = vsyncadd [#allocation5], 0
      %s1710 = sshll.u32 [#allocation18], 4
      %s1711 = int_to_ptr.vmem [resolvable:$true] %s1710
      %s1712 = sshll.u32 %s13, 4
      %s1713 = int_to_ptr.hbm [resolvable:$true] %s1712
      %1718 = dma.vmem_to_hbm [thread:$0]  %s1711, 2048, %s1713, [#allocation5], 256, 256, 16
    $region93: #{tpu_custom_call.1} parent=1 // pred_fallthru
      _
    // Predicated region
    $region94: #{tpu_custom_call.1} parent=1 // pred_check
      _
    $region95: #{tpu_custom_call.1} parent=1 // pred_check_branch
      %1720 = sbr.rel (0) target = $region97
    $region96: #{tpu_custom_call.1} parent=1 // pred_region
      %1722 = dma.done [#allocation5], 2048
    $region97: #{tpu_custom_call.1} parent=1 // pred_fallthru
      _
    %1723 = vsyncpa [#allocation4], 1
    %1724 = vsyncpa [#allocation7], 1
    %1725 = vsyncpa [#allocation10], 1
    %1726 = vsyncpa [#allocation13], 1
    %1727 = vsyncpa [#allocation16], 1
    %1728 = vsyncpa [#allocation5], 1

</llo_original>
